<compile_context>
chip_gen: v7x
topology: tpu7x:2x2x1
jax: 0.10.0
libtpu: 0.0.40
codegen_flags: <defaults>
</compile_context>

<pallas_src>
import math

import jax
import jax.numpy as jnp
from jax.experimental import pallas as pl
from jax.experimental.pallas import tpu as pltpu


def upsample_forward(x, w, b):
    """Nearest-2x upsample followed by 3x3 conv (stride 1, pad 1).

    x: (B, C_in, H, W)   w: (C_out, C_in, 3, 3)   b: (C_out,)
    returns: (B, C_out, 2H, 2W)
    """
    B, C_in, H, W = x.shape
    C_out = w.shape[0]
    Hup, Wup = 2 * H, 2 * W
    dtype = x.dtype

    f32 = jnp.float32
    w = w.astype(f32)

    # ---- column gather matrices A_dx (W, Wup): width dup + L/R zero pad + dx shift
    s = jnp.arange(W)[:, None]
    Xi = jnp.arange(Wup)[None, :]
    A_list = []
    for dx in range(3):
        t = Xi + dx                                   # padded-upsampled column read by tap dx
        A_list.append(((t >= 1) & (t <= Wup) & ((t - 1) // 2 == s)).astype(f32))
    A = jnp.stack(A_list)                             # (3, W, Wup)

    # ---- row gather matrices B_dy (Hup, H): height dup + T/B zero pad + dy shift
    r = jnp.arange(H)[None, :]
    Yi = jnp.arange(Hup)[:, None]
    B_list = []
    for dy in range(3):
        t = Yi + dy
        B_list.append(((t >= 1) & (t <= Hup) & ((t - 1) // 2 == r)).astype(f32))
    Bm = jnp.stack(B_list)                            # (3, Hup, H)

    # ---- M_dx (C_out*Hup, C_in*H): channel contraction + all dy row taps fused
    #      M_dx[(o,Y),(c,r)] = sum_dy w[o,c,dy,dx] * B_dy[Y,r]
    M_list = []
    for dx in range(3):
        m = jnp.einsum("ocd,dyr->oycr", w[:, :, :, dx], Bm)   # (C_out, Hup, C_in, H)
        M_list.append(m.reshape(C_out * Hup, C_in * H))
    M = jnp.stack(M_list)                             # (3, C_out*Hup, C_in*H)

    # ---- bias laid out per output row (o, Y) -> broadcast over lanes in-kernel
    bias_mat = jnp.repeat(b.astype(f32), Hup).reshape(C_out * Hup, 1)

    # Flatten (C_in, H) -> rows; contiguous merge with H % 8 == 0 is a free bitcast.
    xf = x.reshape(B, C_in * H, W)

    def kernel(x_ref, a_ref, m_ref, bias_ref, o_ref, acc_ref):
        xb = x_ref[...].astype(f32)                           # (C_in*H, W)
        # Accumulator in VMEM scratch; initialize with the per-channel bias.
        acc_ref[...] = jnp.broadcast_to(bias_ref[...], acc_ref.shape)
        for dx in range(3):                                   # unrolled, 3 column-tap groups
            # channel contraction + height-dup + row taps: (C_out*Hup, C_in*H)@(C_in*H, W)
            v = jnp.dot(m_ref[dx], xb, preferred_element_type=f32)
            # width-dup + column tap dx: (C_out*Hup, W) @ (W, Wup)
            acc_ref[...] += jnp.dot(v, a_ref[dx], preferred_element_type=f32)
        o_ref[...] = acc_ref[...].astype(o_ref.dtype)

    flops = B * (2 * 3 * (C_out * Hup) * (C_in * H) * W
                 + 2 * 3 * (C_out * Hup) * W * Wup)
    bytes_accessed = 4 * (B * C_in * H * W + B * C_out * Hup * Wup
                          + int(A.size) + int(M.size) + int(bias_mat.size))

    out_flat = pl.pallas_call(
        kernel,
        out_shape=jax.ShapeDtypeStruct((B, C_out * Hup, Wup), dtype),
        grid=(B,),
        in_specs=[
            pl.BlockSpec((None, C_in * H, W), lambda bi: (bi, 0, 0)),
            pl.BlockSpec((3, W, Wup), lambda bi: (0, 0, 0)),
            pl.BlockSpec((3, C_out * Hup, C_in * H), lambda bi: (0, 0, 0)),
            pl.BlockSpec((C_out * Hup, 1), lambda bi: (0, 0)),
        ],
        out_specs=pl.BlockSpec((None, C_out * Hup, Wup), lambda bi: (bi, 0, 0)),
        scratch_shapes=[pltpu.VMEM((C_out * Hup, Wup), f32)],
        compiler_params=pltpu.CompilerParams(dimension_semantics=("parallel",)),
        cost_estimate=pl.CostEstimate(flops=flops, transcendentals=0,
                                      bytes_accessed=bytes_accessed),
    )(xf, A, M, bias_mat)

    # Split (C_out*Hup) -> (C_out, Hup): contiguous split, layout-preserving bitcast.
    return out_flat.reshape(B, C_out, Hup, Wup)


# ------------------------- pure-JAX reference check ------------------------- #

def _reference(x, w, b):
    xu = jnp.repeat(jnp.repeat(x, 2, axis=2), 2, axis=3)
    out = jax.lax.conv_general_dilated(
        xu, w, window_strides=(1, 1), padding=((1, 1), (1, 1)),
        dimension_numbers=("NCHW", "OIHW", "NCHW"))
    return out + b.reshape(1, -1, 1, 1)


if __name__ == "__main__":
    # Upsample(in_channels=4, out_channels=8) applied to a (2, 4, 16, 16) input.
    B, C_in, C_out, H, W = 2, 4, 8, 16, 16

    key = jax.random.PRNGKey(0)
    kx, kw, kb = jax.random.split(key, 3)

    x = jax.random.normal(kx, (B, C_in, H, W), dtype=jnp.float32)
    # nn.Conv2d-style init: U(-1/sqrt(fan_in), 1/sqrt(fan_in)), fan_in = C_in * 3 * 3
    lim = 1.0 / math.sqrt(C_in * 3 * 3)
    w = jax.random.uniform(kw, (C_out, C_in, 3, 3), minval=-lim, maxval=lim,
                           dtype=jnp.float32)
    b = jax.random.uniform(kb, (C_out,), minval=-lim, maxval=lim, dtype=jnp.float32)

    fwd = jax.jit(upsample_forward)
    out = jax.block_until_ready(fwd(x, w, b))

    ref = _reference(x, w, b)
    assert out.shape == (B, C_out, 2 * H, 2 * W)
    assert jnp.allclose(out, ref, atol=1e-4, rtol=1e-4), "mismatch vs reference"

    print("KERNEL_OK")
</pallas_src>

<mosaic_0001>
module attributes {stable_mosaic.version = 11 : i64} {
  func.func @kernel(%arg0: i32, %arg1: memref<1x64x16xf32, #tpu.memory_space<vmem>>, %arg2: memref<3x16x32xf32, #tpu.memory_space<vmem>>, %arg3: memref<3x256x64xf32, #tpu.memory_space<vmem>>, %arg4: memref<256x1xf32, #tpu.memory_space<vmem>>, %arg5: memref<1x256x32xf32, #tpu.memory_space<vmem>>, %arg6: memref<256x32xf32, #tpu.memory_space<vmem>>) attributes {dimension_semantics = [#tpu.dimension_semantics<parallel>], iteration_bounds = array<i64: 2>, scalar_prefetch = 0 : i64, scratch_operands = 1 : i64, tpu.core_type = #tpu.core_type<tc>, window_params = [{transform_indices = @transform_0, window_bounds = array<i64: 1, 64, 16>}, {pipeline_mode = #tpu.pipeline_mode<synchronous>, transform_indices = @transform_1, window_bounds = array<i64: 3, 16, 32>}, {pipeline_mode = #tpu.pipeline_mode<synchronous>, transform_indices = @transform_2, window_bounds = array<i64: 3, 256, 64>}, {pipeline_mode = #tpu.pipeline_mode<synchronous>, transform_indices = @transform_3, window_bounds = array<i64: 256, 1>}, {transform_indices = @transform_4, window_bounds = array<i64: 1, 256, 32>}]} {
    %c0 = arith.constant 0 : index
    %c0_0 = arith.constant 0 : index
    %c0_1 = arith.constant 0 : index
    %0 = vector.load %arg1[%c0, %c0_0, %c0_1] : memref<1x64x16xf32, #tpu.memory_space<vmem>>, vector<1x64x16xf32>
    %1 = vector.shape_cast %0 : vector<1x64x16xf32> to vector<64x16xf32>
    %c0_2 = arith.constant 0 : index
    %c0_3 = arith.constant 0 : index
    %2 = vector.load %arg4[%c0_2, %c0_3] : memref<256x1xf32, #tpu.memory_space<vmem>>, vector<256x1xf32>
    %3 = vector.shape_cast %2 : vector<256x1xf32> to vector<256x1xf32>
    %4 = vector.broadcast %3 : vector<256x1xf32> to vector<256x32xf32>
    %c0_4 = arith.constant 0 : index
    %c0_5 = arith.constant 0 : index
    %5 = vector.load %arg6[%c0_4, %c0_5] : memref<256x32xf32, #tpu.memory_space<vmem>>, vector<256x32xf32>
    tpu.vector_store %arg6[%c0_4, %c0_5], %4 {strides = array<i32>} : memref<256x32xf32, #tpu.memory_space<vmem>>, vector<256x32xf32>,
    %c0_6 = arith.constant 0 : index
    %c0_7 = arith.constant 0 : index
    %c0_8 = arith.constant 0 : index
    %6 = vector.load %arg3[%c0_6, %c0_7, %c0_8] : memref<3x256x64xf32, #tpu.memory_space<vmem>>, vector<1x256x64xf32>
    %7 = vector.shape_cast %6 : vector<1x256x64xf32> to vector<256x64xf32>
    %cst = arith.constant dense<0.000000e+00> : vector<256x16xf32>
    %8 = tpu.matmul %7, %1, %cst {dimension_numbers = #tpu.dot_dimension_numbers<[1], [0], [0], [1], [0, 0, 1, 1], [], []>} : vector<256x64xf32>, vector<64x16xf32>, vector<256x16xf32> -> vector<256x16xf32>
    %c0_9 = arith.constant 0 : index
    %c0_10 = arith.constant 0 : index
    %9 = vector.load %arg6[%c0_9, %c0_10] : memref<256x32xf32, #tpu.memory_space<vmem>>, vector<256x32xf32>
    %c0_11 = arith.constant 0 : index
    %c0_12 = arith.constant 0 : index
    %c0_13 = arith.constant 0 : index
    %10 = vector.load %arg2[%c0_11, %c0_12, %c0_13] : memref<3x16x32xf32, #tpu.memory_space<vmem>>, vector<1x16x32xf32>
    %11 = vector.shape_cast %10 : vector<1x16x32xf32> to vector<16x32xf32>
    %cst_14 = arith.constant dense<0.000000e+00> : vector<256x32xf32>
    %12 = tpu.matmul %8, %11, %cst_14 {dimension_numbers = #tpu.dot_dimension_numbers<[1], [0], [0], [1], [0, 0, 1, 1], [], []>} : vector<256x16xf32>, vector<16x32xf32>, vector<256x32xf32> -> vector<256x32xf32>
    %13 = arith.addf %9, %12 : vector<256x32xf32>
    %c0_15 = arith.constant 0 : index
    %c0_16 = arith.constant 0 : index
    %14 = vector.load %arg6[%c0_15, %c0_16] : memref<256x32xf32, #tpu.memory_space<vmem>>, vector<256x32xf32>
    tpu.vector_store %arg6[%c0_15, %c0_16], %13 {strides = array<i32>} : memref<256x32xf32, #tpu.memory_space<vmem>>, vector<256x32xf32>,
    %c1 = arith.constant 1 : index
    %c0_17 = arith.constant 0 : index
    %c0_18 = arith.constant 0 : index
    %15 = vector.load %arg3[%c1, %c0_17, %c0_18] : memref<3x256x64xf32, #tpu.memory_space<vmem>>, vector<1x256x64xf32>
    %16 = vector.shape_cast %15 : vector<1x256x64xf32> to vector<256x64xf32>
    %cst_19 = arith.constant dense<0.000000e+00> : vector<256x16xf32>
    %17 = tpu.matmul %16, %1, %cst_19 {dimension_numbers = #tpu.dot_dimension_numbers<[1], [0], [0], [1], [0, 0, 1, 1], [], []>} : vector<256x64xf32>, vector<64x16xf32>, vector<256x16xf32> -> vector<256x16xf32>
    %c0_20 = arith.constant 0 : index
    %c0_21 = arith.constant 0 : index
    %18 = vector.load %arg6[%c0_20, %c0_21] : memref<256x32xf32, #tpu.memory_space<vmem>>, vector<256x32xf32>
    %c1_22 = arith.constant 1 : index
    %c0_23 = arith.constant 0 : index
    %c0_24 = arith.constant 0 : index
    %19 = vector.load %arg2[%c1_22, %c0_23, %c0_24] : memref<3x16x32xf32, #tpu.memory_space<vmem>>, vector<1x16x32xf32>
    %20 = vector.shape_cast %19 : vector<1x16x32xf32> to vector<16x32xf32>
    %cst_25 = arith.constant dense<0.000000e+00> : vector<256x32xf32>
    %21 = tpu.matmul %17, %20, %cst_25 {dimension_numbers = #tpu.dot_dimension_numbers<[1], [0], [0], [1], [0, 0, 1, 1], [], []>} : vector<256x16xf32>, vector<16x32xf32>, vector<256x32xf32> -> vector<256x32xf32>
    %22 = arith.addf %18, %21 : vector<256x32xf32>
    %c0_26 = arith.constant 0 : index
    %c0_27 = arith.constant 0 : index
    %23 = vector.load %arg6[%c0_26, %c0_27] : memref<256x32xf32, #tpu.memory_space<vmem>>, vector<256x32xf32>
    tpu.vector_store %arg6[%c0_26, %c0_27], %22 {strides = array<i32>} : memref<256x32xf32, #tpu.memory_space<vmem>>, vector<256x32xf32>,
    %c2 = arith.constant 2 : index
    %c0_28 = arith.constant 0 : index
    %c0_29 = arith.constant 0 : index
    %24 = vector.load %arg3[%c2, %c0_28, %c0_29] : memref<3x256x64xf32, #tpu.memory_space<vmem>>, vector<1x256x64xf32>
    %25 = vector.shape_cast %24 : vector<1x256x64xf32> to vector<256x64xf32>
    %cst_30 = arith.constant dense<0.000000e+00> : vector<256x16xf32>
    %26 = tpu.matmul %25, %1, %cst_30 {dimension_numbers = #tpu.dot_dimension_numbers<[1], [0], [0], [1], [0, 0, 1, 1], [], []>} : vector<256x64xf32>, vector<64x16xf32>, vector<256x16xf32> -> vector<256x16xf32>
    %c0_31 = arith.constant 0 : index
    %c0_32 = arith.constant 0 : index
    %27 = vector.load %arg6[%c0_31, %c0_32] : memref<256x32xf32, #tpu.memory_space<vmem>>, vector<256x32xf32>
    %c2_33 = arith.constant 2 : index
    %c0_34 = arith.constant 0 : index
    %c0_35 = arith.constant 0 : index
    %28 = vector.load %arg2[%c2_33, %c0_34, %c0_35] : memref<3x16x32xf32, #tpu.memory_space<vmem>>, vector<1x16x32xf32>
    %29 = vector.shape_cast %28 : vector<1x16x32xf32> to vector<16x32xf32>
    %cst_36 = arith.constant dense<0.000000e+00> : vector<256x32xf32>
    %30 = tpu.matmul %26, %29, %cst_36 {dimension_numbers = #tpu.dot_dimension_numbers<[1], [0], [0], [1], [0, 0, 1, 1], [], []>} : vector<256x16xf32>, vector<16x32xf32>, vector<256x32xf32> -> vector<256x32xf32>
    %31 = arith.addf %27, %30 : vector<256x32xf32>
    %c0_37 = arith.constant 0 : index
    %c0_38 = arith.constant 0 : index
    %32 = vector.load %arg6[%c0_37, %c0_38] : memref<256x32xf32, #tpu.memory_space<vmem>>, vector<256x32xf32>
    tpu.vector_store %arg6[%c0_37, %c0_38], %31 {strides = array<i32>} : memref<256x32xf32, #tpu.memory_space<vmem>>, vector<256x32xf32>,
    %c0_39 = arith.constant 0 : index
    %c0_40 = arith.constant 0 : index
    %33 = vector.load %arg6[%c0_39, %c0_40] : memref<256x32xf32, #tpu.memory_space<vmem>>, vector<256x32xf32>
    %c0_41 = arith.constant 0 : index
    %c0_42 = arith.constant 0 : index
    %c0_43 = arith.constant 0 : index
    %34 = vector.load %arg5[%c0_41, %c0_42, %c0_43] : memref<1x256x32xf32, #tpu.memory_space<vmem>>, vector<1x256x32xf32>
    %35 = vector.shape_cast %34 : vector<1x256x32xf32> to vector<256x32xf32>
    %36 = vector.shape_cast %33 : vector<256x32xf32> to vector<1x256x32xf32>
    tpu.vector_store %arg5[%c0_41, %c0_42, %c0_43], %36 {strides = array<i32>} : memref<1x256x32xf32, #tpu.memory_space<vmem>>, vector<1x256x32xf32>,
    return
  }
  func.func @transform_0(%arg0: i32) -> (i32, i32, i32) {
    %c0_i32 = arith.constant 0 : i32
    %c0_i32_0 = arith.constant 0 : i32
    %c0_i32_1 = arith.constant 0 : i32
    return %arg0, %c0_i32, %c0_i32_0 : i32, i32, i32
  }
  func.func @transform_1(%arg0: i32) -> (i32, i32, i32) {
    %c0_i32 = arith.constant 0 : i32
    %c0_i32_0 = arith.constant 0 : i32
    %c0_i32_1 = arith.constant 0 : i32
    %c0_i32_2 = arith.constant 0 : i32
    return %c0_i32, %c0_i32_0, %c0_i32_1 : i32, i32, i32
  }
  func.func @transform_2(%arg0: i32) -> (i32, i32, i32) {
    %c0_i32 = arith.constant 0 : i32
    %c0_i32_0 = arith.constant 0 : i32
    %c0_i32_1 = arith.constant 0 : i32
    %c0_i32_2 = arith.constant 0 : i32
    return %c0_i32, %c0_i32_0, %c0_i32_1 : i32, i32, i32
  }
  func.func @transform_3(%arg0: i32) -> (i32, i32) {
    %c0_i32 = arith.constant 0 : i32
    %c0_i32_0 = arith.constant 0 : i32
    %c0_i32_1 = arith.constant 0 : i32
    return %c0_i32, %c0_i32_0 : i32, i32
  }
  func.func @transform_4(%arg0: i32) -> (i32, i32, i32) {
    %c0_i32 = arith.constant 0 : i32
    %c0_i32_0 = arith.constant 0 : i32
    %c0_i32_1 = arith.constant 0 : i32
    return %arg0, %c0_i32, %c0_i32_0 : i32, i32, i32
  }
}

</mosaic_0001>

<llo_original>
// kernel: upsample_forward.1
$region0: #{upsample_forward.1}
  #allocation0 [shape = 'u32[]', space=smem, size = 0x4, offset = 0x4, fixed_abs, tag = 'smem constant byte address 0x4 - core index']
  #allocation1 [shape = 'u32[144,128]{1,0:T(1,128)}', space=vmem, size = 0x12000, scoped, tag = 'internal scratch']
  #allocation2 [shape = 'f32[256,32]{1,0:T(8,128)}', space=vmem, size = 0x20000, scoped, tag = 'scratch operand']
  %s0 = inlined_call_operand.vmem [shape: f32[2,64,16], index: 0, kind: input, shape index: {}]
  %s1 = inlined_call_operand.vmem [shape: f32[3,16,32], index: 1, kind: input, shape index: {}]
  %s2 = inlined_call_operand.vmem [shape: f32[3,256,64], index: 2, kind: input, shape index: {}]
  %s3 = inlined_call_operand.vmem [shape: f32[256,1], index: 3, kind: input, shape index: {}]
  %s4 = inlined_call_operand.hbm [shape: f32[2,256,32], index: 4, kind: output, shape index: {}]
  %s5 = sld [smem:[#allocation0]]
  $region49: #{upsample_forward.1} parent=0
    _
  %s7 = ssub.s32 1, %s5
  %s8 = scalar_select 0, %s7, %s5
  $region1: #{upsample_forward.1} parent=0
    #allocation3 [shape = 'u8[262144]{0}', space=vmem, size = 0x40000, scoped, tag = 'output window, operand 0']
    #allocation4 [shape = 's32[2]{0}', space=sflag, size = 0x8, scoped, tag = 'scoped memory for upsample_forward.1']
    %9 = vsyncpa [#allocation4], 0
    %s10 = scalar_lea.sflag [#allocation4], 1
    %11 = vsyncpa %s10, 0
    loop: start=0, step=1, limit=4
    $region2: #{upsample_forward.1} parent=1 // loop_pre_header
      _
    $region3: #{upsample_forward.1} parent=1 // loop_header
      %s13 = sphi 0, %s17
      %p14 = scmp.ge.s32.totalorder %s13, 4
      %s23 = sphi 0, %s25
      %s26 = sphi 0, %s23
      %s27 = sphi 0, %s26
      %s43 = sphi 0, %s27
      %s47 = sphi 0, %s47
      %s49 = sphi 0, %s47
      %s50 = sphi 0, %s49
      %s64 = sphi 0, %s50
      %s68 = sphi 0, %s68
      %s70 = sphi 0, %s68
      %s71 = sphi 0, %s70
      %s85 = sphi 0, %s71
      %s89 = sphi 0, %s89
      %s91 = sphi 0, %s89
      %s92 = sphi 0, %s91
      %s106 = sphi 0, %s92
      %s112 = sphi 0, %s114
      %s115 = sphi 0, %s112
      %s116 = sphi 0, %s115
      %s132 = sphi 0, %s116
    $region4: #{upsample_forward.1} parent=1 // loop_header_branch
      %16 = sbr.rel (%p14) target = $region8
    $region5: #{upsample_forward.1} parent=1 // loop_body
      %s18 = ssub.s32 %s13, 1
      %s19 = ssub.s32 %s13, 2
      %s20 = sadd.s32 %s13, 1
      %s21 = ssub.s32 %s13, %s20
      %p22 = scmp.eq.s32.totalorder %s21, 0
      %s24 = sadd.s32 %s23, 1
      %s25 = scalar_select %p22, %s23, %s24
      %p28 = pneg %p22
      %p29 = scmp.eq.s32.totalorder %s13, 1
      %p30 = por %p28, %p29
      %p31 = scmp.ne.s32.totalorder %s23, %s26
      %p32 = scmp.eq.s32.totalorder %s13, 0
      %p33 = por %p31, %p32
      %p34 = scmp.ne.s32.totalorder %s23, %s26
      %p35 = scmp.eq.s32.totalorder %s18, 1
      %p36 = por %p34, %p35
      %p37 = scmp.ne.s32.totalorder %s26, %s27
      %p38 = scmp.eq.s32.totalorder %s18, 0
      %p39 = por %p37, %p38
      %p40 = scmp.ne.s32.totalorder %s26, %s27
      %p41 = scmp.eq.s32.totalorder %s19, 1
      %p42 = por %p40, %p41
      %p44 = scmp.ne.s32.totalorder %s27, %s43
      %p45 = scmp.eq.s32.totalorder %s19, 0
      %p46 = por %p44, %p45
      %s48 = sadd.s32 %s47, 1
      %p51 = scmp.eq.s32.totalorder %s13, 1
      %p52 = scmp.ne.s32.totalorder %s47, %s49
      %p53 = scmp.eq.s32.totalorder %s13, 0
      %p54 = por %p52, %p53
      %p55 = scmp.ne.s32.totalorder %s47, %s49
      %p56 = scmp.eq.s32.totalorder %s18, 1
      %p57 = por %p55, %p56
      %p58 = scmp.ne.s32.totalorder %s49, %s50
      %p59 = scmp.eq.s32.totalorder %s18, 0
      %p60 = por %p58, %p59
      %p61 = scmp.ne.s32.totalorder %s49, %s50
      %p62 = scmp.eq.s32.totalorder %s19, 1
      %p63 = por %p61, %p62
      %p65 = scmp.ne.s32.totalorder %s50, %s64
      %p66 = scmp.eq.s32.totalorder %s19, 0
      %p67 = por %p65, %p66
      %s69 = sadd.s32 %s68, 1
      %p72 = scmp.eq.s32.totalorder %s13, 1
      %p73 = scmp.ne.s32.totalorder %s68, %s70
      %p74 = scmp.eq.s32.totalorder %s13, 0
      %p75 = por %p73, %p74
      %p76 = scmp.ne.s32.totalorder %s68, %s70
      %p77 = scmp.eq.s32.totalorder %s18, 1
      %p78 = por %p76, %p77
      %p79 = scmp.ne.s32.totalorder %s70, %s71
      %p80 = scmp.eq.s32.totalorder %s18, 0
      %p81 = por %p79, %p80
      %p82 = scmp.ne.s32.totalorder %s70, %s71
      %p83 = scmp.eq.s32.totalorder %s19, 1
      %p84 = por %p82, %p83
      %p86 = scmp.ne.s32.totalorder %s71, %s85
      %p87 = scmp.eq.s32.totalorder %s19, 0
      %p88 = por %p86, %p87
      %s90 = sadd.s32 %s89, 1
      %p93 = scmp.eq.s32.totalorder %s13, 1
      %p94 = scmp.ne.s32.totalorder %s89, %s91
      %p95 = scmp.eq.s32.totalorder %s13, 0
      %p96 = por %p94, %p95
      %p97 = scmp.ne.s32.totalorder %s89, %s91
      %p98 = scmp.eq.s32.totalorder %s18, 1
      %p99 = por %p97, %p98
      %p100 = scmp.ne.s32.totalorder %s91, %s92
      %p101 = scmp.eq.s32.totalorder %s18, 0
      %p102 = por %p100, %p101
      %p103 = scmp.ne.s32.totalorder %s91, %s92
      %p104 = scmp.eq.s32.totalorder %s19, 1
      %p105 = por %p103, %p104
      %p107 = scmp.ne.s32.totalorder %s92, %s106
      %p108 = scmp.eq.s32.totalorder %s19, 0
      %p109 = por %p107, %p108
      %s110 = ssub.s32 %s13, %s20
      %p111 = scmp.eq.s32.totalorder %s110, 0
      %s113 = sadd.s32 %s112, 1
      %s114 = scalar_select %p111, %s112, %s113
      %p117 = pneg %p111
      %p118 = scmp.eq.s32.totalorder %s13, 1
      %p119 = por %p117, %p118
      %p120 = scmp.ne.s32.totalorder %s112, %s115
      %p121 = scmp.eq.s32.totalorder %s13, 0
      %p122 = por %p120, %p121
      %p123 = scmp.ne.s32.totalorder %s112, %s115
      %p124 = scmp.eq.s32.totalorder %s18, 1
      %p125 = por %p123, %p124
      %p126 = scmp.ne.s32.totalorder %s115, %s116
      %p127 = scmp.eq.s32.totalorder %s18, 0
      %p128 = por %p126, %p127
      %p129 = scmp.ne.s32.totalorder %s115, %s116
      %p130 = scmp.eq.s32.totalorder %s19, 1
      %p131 = por %p129, %p130
      %p133 = scmp.ne.s32.totalorder %s116, %s132
      %p134 = scmp.eq.s32.totalorder %s19, 0
      %p135 = por %p133, %p134
      %p136 = scmp.le.s32.totalorder 1, %s13
      %p137 = scmp.lt.s32.totalorder %s13, 3
      %p138 = pnand %p136, %p137
      %p139 = pneg %p138
      // Predicated region
      $region9: #{upsample_forward.1} parent=5 // pred_check
        _
      $region10: #{upsample_forward.1} parent=5 // pred_check_branch
        %141 = sbr.rel (%p138) target = $region12
      $region11: #{upsample_forward.1} parent=5 // pred_region
        %s142 = ssub.s32 %s13, 1
        // Predicated region
        $region13: #{upsample_forward.1} parent=11 // pred_check
          %p143 = pneg %p60
        $region14: #{upsample_forward.1} parent=11 // pred_check_branch
          %145 = sbr.rel (%p143) target = $region16
        $region15: #{upsample_forward.1} parent=11 // pred_region
          _
        $region16: #{upsample_forward.1} parent=11 // pred_fallthru
          _
        // Predicated region
        $region17: #{upsample_forward.1} parent=11 // pred_check
          %p146 = pneg %p81
        $region18: #{upsample_forward.1} parent=11 // pred_check_branch
          %148 = sbr.rel (%p146) target = $region20
        $region19: #{upsample_forward.1} parent=11 // pred_region
          _
        $region20: #{upsample_forward.1} parent=11 // pred_fallthru
          _
        // Predicated region
        $region21: #{upsample_forward.1} parent=11 // pred_check
          %p149 = pneg %p102
        $region22: #{upsample_forward.1} parent=11 // pred_check_branch
          %151 = sbr.rel (%p149) target = $region24
        $region23: #{upsample_forward.1} parent=11 // pred_region
          _
        $region24: #{upsample_forward.1} parent=11 // pred_fallthru
          _
      $region12: #{upsample_forward.1} parent=5 // pred_fallthru
        _
      %p152 = scmp.lt.s32.totalorder %s13, 2
      // Predicated region
      $region25: #{upsample_forward.1} parent=5 // pred_check
        %p153 = pneg %p152
      $region26: #{upsample_forward.1} parent=5 // pred_check_branch
        %155 = sbr.rel (%p153) target = $region28
      $region27: #{upsample_forward.1} parent=5 // pred_region
        // Predicated region
        $region29: #{upsample_forward.1} parent=27 // pred_check
          %p156 = pneg %p33
        $region30: #{upsample_forward.1} parent=27 // pred_check_branch
          %158 = sbr.rel (%p156) target = $region32
        $region31: #{upsample_forward.1} parent=27 // pred_region
          %p159 = scmp.lt.s32.totalorder %s13, 1
          %s160 = scalar_select %p159, %s13, 1
          %s161 = smul.addr %s160, 8
          %s162 = smul.addr %s161, 8
          %s163 = scalar_lea.vmem %s0, %s162
        $region32: #{upsample_forward.1} parent=27 // pred_fallthru
          _
      $region28: #{upsample_forward.1} parent=5 // pred_fallthru
        _
      %p164 = scmp.le.s32.totalorder 1, %s13
      %p165 = scmp.lt.s32.totalorder %s13, 3
      %p166 = pnand %p164, %p165
      %p167 = pneg %p166
      // Predicated region
      $region33: #{upsample_forward.1} parent=5 // pred_check
        _
      $region34: #{upsample_forward.1} parent=5 // pred_check_branch
        %169 = sbr.rel (%p166) target = $region36
      $region35: #{upsample_forward.1} parent=5 // pred_region
        %s170 = ssub.s32 %s13, 1
        %p171 = scmp.lt.s32.totalorder %s18, 1
        %s172 = scalar_select %p171, %s18, 1
        %s173 = smul.addr %s172, 8
        %s174 = smul.addr %s173, 8
        %s175 = scalar_lea.vmem %s0, %s174
        %p176 = pneg %p39
        %p177 = pneg %p36
        %p178 = pneg %p60
        %p179 = pneg %p57
        %p180 = pneg %p81
        %p181 = pneg %p78
        %p182 = pneg %p102
        %p183 = pneg %p99
        %p184 = pneg %p128
        %p185 = pneg %p125
        %s186 = sand.u32 %s115, 1
        %s187 = scalar_lea.sflag [#allocation4], %s186
        %s188 = sand.u32 %s115, 1
        %s189 = smul.addr %s188, 256
        %s190 = scalar_lea.vmem [#allocation3], %s189
        %p191 = scmp.lt.s32.totalorder %s18, 1
        %s192 = scalar_select %p191, %s18, 1
        %s193 = smul.addr %s192, 8
        %s194 = smul.addr %s193, 8
        %s195 = scalar_lea.vmem %s0, %s194
        %v196 = vld [vmem:[%s195] sm:$0xff]
        %v197 = vld [vmem:[%s195 + $0x8] sm:$0xff]
        %v198 = vld [vmem:[%s195 + $0x10] sm:$0xff]
        %v199 = vld [vmem:[%s195 + $0x18] sm:$0xff]
        %v200 = vld [vmem:[%s195 + $0x20] sm:$0xff]
        %v201 = vld [vmem:[%s195 + $0x28] sm:$0xff]
        %v202 = vld [vmem:[%s195 + $0x30] sm:$0xff]
        %v203 = vld [vmem:[%s195 + $0x38] sm:$0xff]
        %v204 = vld [vmem:[%s3] sm:$0xff]
        %v205 = vld [vmem:[%s3 + $0x8] sm:$0xff]
        %v206 = vld [vmem:[%s3 + $0x10] sm:$0xff]
        %v207 = vld [vmem:[%s3 + $0x18] sm:$0xff]
        %v208 = vld [vmem:[%s3 + $0x20] sm:$0xff]
        %v209 = vld [vmem:[%s3 + $0x28] sm:$0xff]
        %v210 = vld [vmem:[%s3 + $0x30] sm:$0xff]
        %v211 = vld [vmem:[%s3 + $0x38] sm:$0xff]
        %v212 = vld [vmem:[%s3 + $0x40] sm:$0xff]
        %v213 = vld [vmem:[%s3 + $0x48] sm:$0xff]
        %v214 = vld [vmem:[%s3 + $0x50] sm:$0xff]
        %v215 = vld [vmem:[%s3 + $0x58] sm:$0xff]
        %v216 = vld [vmem:[%s3 + $0x60] sm:$0xff]
        %v217 = vld [vmem:[%s3 + $0x68] sm:$0xff]
        %v218 = vld [vmem:[%s3 + $0x70] sm:$0xff]
        %v219 = vld [vmem:[%s3 + $0x78] sm:$0xff]
        %v220 = vld [vmem:[%s3 + $0x80] sm:$0xff]
        %v221 = vld [vmem:[%s3 + $0x88] sm:$0xff]
        %v222 = vld [vmem:[%s3 + $0x90] sm:$0xff]
        %v223 = vld [vmem:[%s3 + $0x98] sm:$0xff]
        %v224 = vld [vmem:[%s3 + $0xa0] sm:$0xff]
        %v225 = vld [vmem:[%s3 + $0xa8] sm:$0xff]
        %v226 = vld [vmem:[%s3 + $0xb0] sm:$0xff]
        %v227 = vld [vmem:[%s3 + $0xb8] sm:$0xff]
        %v228 = vld [vmem:[%s3 + $0xc0] sm:$0xff]
        %v229 = vld [vmem:[%s3 + $0xc8] sm:$0xff]
        %v230 = vld [vmem:[%s3 + $0xd0] sm:$0xff]
        %v231 = vld [vmem:[%s3 + $0xd8] sm:$0xff]
        %v232 = vld [vmem:[%s3 + $0xe0] sm:$0xff]
        %v233 = vld [vmem:[%s3 + $0xe8] sm:$0xff]
        %v234 = vld [vmem:[%s3 + $0xf0] sm:$0xff]
        %v235 = vld [vmem:[%s3 + $0xf8] sm:$0xff]
        %237 = vset.pattern.permute.xlu0 0
        %238 = vperm.xlu0 %237, %v204
        %v239 = vpop.permute.xlu0 %238
        %242 = vset.pattern.permute.xlu0 0
        %243 = vperm.xlu0 %242, %v205
        %v244 = vpop.permute.xlu0 %243
        %247 = vset.pattern.permute.xlu0 0
        %248 = vperm.xlu0 %247, %v206
        %v249 = vpop.permute.xlu0 %248
        %252 = vset.pattern.permute.xlu0 0
        %253 = vperm.xlu0 %252, %v207
        %v254 = vpop.permute.xlu0 %253
        %257 = vset.pattern.permute.xlu0 0
        %258 = vperm.xlu0 %257, %v208
        %v259 = vpop.permute.xlu0 %258
        %262 = vset.pattern.permute.xlu0 0
        %263 = vperm.xlu0 %262, %v209
        %v264 = vpop.permute.xlu0 %263
        %267 = vset.pattern.permute.xlu0 0
        %268 = vperm.xlu0 %267, %v210
        %v269 = vpop.permute.xlu0 %268
        %272 = vset.pattern.permute.xlu0 0
        %273 = vperm.xlu0 %272, %v211
        %v274 = vpop.permute.xlu0 %273
        %277 = vset.pattern.permute.xlu0 0
        %278 = vperm.xlu0 %277, %v212
        %v279 = vpop.permute.xlu0 %278
        %282 = vset.pattern.permute.xlu0 0
        %283 = vperm.xlu0 %282, %v213
        %v284 = vpop.permute.xlu0 %283
        %287 = vset.pattern.permute.xlu0 0
        %288 = vperm.xlu0 %287, %v214
        %v289 = vpop.permute.xlu0 %288
        %292 = vset.pattern.permute.xlu0 0
        %293 = vperm.xlu0 %292, %v215
        %v294 = vpop.permute.xlu0 %293
        %297 = vset.pattern.permute.xlu0 0
        %298 = vperm.xlu0 %297, %v216
        %v299 = vpop.permute.xlu0 %298
        %302 = vset.pattern.permute.xlu0 0
        %303 = vperm.xlu0 %302, %v217
        %v304 = vpop.permute.xlu0 %303
        %307 = vset.pattern.permute.xlu0 0
        %308 = vperm.xlu0 %307, %v218
        %v309 = vpop.permute.xlu0 %308
        %312 = vset.pattern.permute.xlu0 0
        %313 = vperm.xlu0 %312, %v219
        %v314 = vpop.permute.xlu0 %313
        %317 = vset.pattern.permute.xlu0 0
        %318 = vperm.xlu0 %317, %v220
        %v319 = vpop.permute.xlu0 %318
        %322 = vset.pattern.permute.xlu0 0
        %323 = vperm.xlu0 %322, %v221
        %v324 = vpop.permute.xlu0 %323
        %327 = vset.pattern.permute.xlu0 0
        %328 = vperm.xlu0 %327, %v222
        %v329 = vpop.permute.xlu0 %328
        %332 = vset.pattern.permute.xlu0 0
        %333 = vperm.xlu0 %332, %v223
        %v334 = vpop.permute.xlu0 %333
        %337 = vset.pattern.permute.xlu0 0
        %338 = vperm.xlu0 %337, %v224
        %v339 = vpop.permute.xlu0 %338
        %342 = vset.pattern.permute.xlu0 0
        %343 = vperm.xlu0 %342, %v225
        %v344 = vpop.permute.xlu0 %343
        %347 = vset.pattern.permute.xlu0 0
        %348 = vperm.xlu0 %347, %v226
        %v349 = vpop.permute.xlu0 %348
        %352 = vset.pattern.permute.xlu0 0
        %353 = vperm.xlu0 %352, %v227
        %v354 = vpop.permute.xlu0 %353
        %357 = vset.pattern.permute.xlu0 0
        %358 = vperm.xlu0 %357, %v228
        %v359 = vpop.permute.xlu0 %358
        %362 = vset.pattern.permute.xlu0 0
        %363 = vperm.xlu0 %362, %v229
        %v364 = vpop.permute.xlu0 %363
        %367 = vset.pattern.permute.xlu0 0
        %368 = vperm.xlu0 %367, %v230
        %v369 = vpop.permute.xlu0 %368
        %372 = vset.pattern.permute.xlu0 0
        %373 = vperm.xlu0 %372, %v231
        %v374 = vpop.permute.xlu0 %373
        %377 = vset.pattern.permute.xlu0 0
        %378 = vperm.xlu0 %377, %v232
        %v379 = vpop.permute.xlu0 %378
        %382 = vset.pattern.permute.xlu0 0
        %383 = vperm.xlu0 %382, %v233
        %v384 = vpop.permute.xlu0 %383
        %387 = vset.pattern.permute.xlu0 0
        %388 = vperm.xlu0 %387, %v234
        %v389 = vpop.permute.xlu0 %388
        %392 = vset.pattern.permute.xlu0 0
        %393 = vperm.xlu0 %392, %v235
        %v394 = vpop.permute.xlu0 %393
        %vm396 = vcmask 261120
        %397 = vst.msk [vmem:[#allocation2] sm:$0xff] %vm396, %v239
        %398 = vst.msk [vmem:[#allocation2 + $0x8] sm:$0xff] %vm396, %v244
        %399 = vst.msk [vmem:[#allocation2 + $0x10] sm:$0xff] %vm396, %v249
        %400 = vst.msk [vmem:[#allocation2 + $0x18] sm:$0xff] %vm396, %v254
        %401 = vst.msk [vmem:[#allocation2 + $0x20] sm:$0xff] %vm396, %v259
        %402 = vst.msk [vmem:[#allocation2 + $0x28] sm:$0xff] %vm396, %v264
        %403 = vst.msk [vmem:[#allocation2 + $0x30] sm:$0xff] %vm396, %v269
        %404 = vst.msk [vmem:[#allocation2 + $0x38] sm:$0xff] %vm396, %v274
        %405 = vst.msk [vmem:[#allocation2 + $0x40] sm:$0xff] %vm396, %v279
        %406 = vst.msk [vmem:[#allocation2 + $0x48] sm:$0xff] %vm396, %v284
        %407 = vst.msk [vmem:[#allocation2 + $0x50] sm:$0xff] %vm396, %v289
        %408 = vst.msk [vmem:[#allocation2 + $0x58] sm:$0xff] %vm396, %v294
        %409 = vst.msk [vmem:[#allocation2 + $0x60] sm:$0xff] %vm396, %v299
        %410 = vst.msk [vmem:[#allocation2 + $0x68] sm:$0xff] %vm396, %v304
        %411 = vst.msk [vmem:[#allocation2 + $0x70] sm:$0xff] %vm396, %v309
        %412 = vst.msk [vmem:[#allocation2 + $0x78] sm:$0xff] %vm396, %v314
        %413 = vst.msk [vmem:[#allocation2 + $0x80] sm:$0xff] %vm396, %v319
        %414 = vst.msk [vmem:[#allocation2 + $0x88] sm:$0xff] %vm396, %v324
        %415 = vst.msk [vmem:[#allocation2 + $0x90] sm:$0xff] %vm396, %v329
        %416 = vst.msk [vmem:[#allocation2 + $0x98] sm:$0xff] %vm396, %v334
        %417 = vst.msk [vmem:[#allocation2 + $0xa0] sm:$0xff] %vm396, %v339
        %418 = vst.msk [vmem:[#allocation2 + $0xa8] sm:$0xff] %vm396, %v344
        %419 = vst.msk [vmem:[#allocation2 + $0xb0] sm:$0xff] %vm396, %v349
        %420 = vst.msk [vmem:[#allocation2 + $0xb8] sm:$0xff] %vm396, %v354
        %421 = vst.msk [vmem:[#allocation2 + $0xc0] sm:$0xff] %vm396, %v359
        %422 = vst.msk [vmem:[#allocation2 + $0xc8] sm:$0xff] %vm396, %v364
        %423 = vst.msk [vmem:[#allocation2 + $0xd0] sm:$0xff] %vm396, %v369
        %424 = vst.msk [vmem:[#allocation2 + $0xd8] sm:$0xff] %vm396, %v374
        %425 = vst.msk [vmem:[#allocation2 + $0xe0] sm:$0xff] %vm396, %v379
        %426 = vst.msk [vmem:[#allocation2 + $0xe8] sm:$0xff] %vm396, %v384
        %427 = vst.msk [vmem:[#allocation2 + $0xf0] sm:$0xff] %vm396, %v389
        %428 = vst.msk [vmem:[#allocation2 + $0xf8] sm:$0xff] %vm396, %v394
        %v429 = vld [vmem:[%s2] sm:$0xff]
        %v430 = vld [vmem:[%s2 + $0x8] sm:$0xff]
        %v431 = vld [vmem:[%s2 + $0x10] sm:$0xff]
        %v432 = vld [vmem:[%s2 + $0x18] sm:$0xff]
        %v433 = vld [vmem:[%s2 + $0x20] sm:$0xff]
        %v434 = vld [vmem:[%s2 + $0x28] sm:$0xff]
        %v435 = vld [vmem:[%s2 + $0x30] sm:$0xff]
        %v436 = vld [vmem:[%s2 + $0x38] sm:$0xff]
        %v437 = vld [vmem:[%s2 + $0x40] sm:$0xff]
        %v438 = vld [vmem:[%s2 + $0x48] sm:$0xff]
        %v439 = vld [vmem:[%s2 + $0x50] sm:$0xff]
        %v440 = vld [vmem:[%s2 + $0x58] sm:$0xff]
        %v441 = vld [vmem:[%s2 + $0x60] sm:$0xff]
        %v442 = vld [vmem:[%s2 + $0x68] sm:$0xff]
        %v443 = vld [vmem:[%s2 + $0x70] sm:$0xff]
        %v444 = vld [vmem:[%s2 + $0x78] sm:$0xff]
        %v445 = vld [vmem:[%s2 + $0x80] sm:$0xff]
        %v446 = vld [vmem:[%s2 + $0x88] sm:$0xff]
        %v447 = vld [vmem:[%s2 + $0x90] sm:$0xff]
        %v448 = vld [vmem:[%s2 + $0x98] sm:$0xff]
        %v449 = vld [vmem:[%s2 + $0xa0] sm:$0xff]
        %v450 = vld [vmem:[%s2 + $0xa8] sm:$0xff]
        %v451 = vld [vmem:[%s2 + $0xb0] sm:$0xff]
        %v452 = vld [vmem:[%s2 + $0xb8] sm:$0xff]
        %v453 = vld [vmem:[%s2 + $0xc0] sm:$0xff]
        %v454 = vld [vmem:[%s2 + $0xc8] sm:$0xff]
        %v455 = vld [vmem:[%s2 + $0xd0] sm:$0xff]
        %v456 = vld [vmem:[%s2 + $0xd8] sm:$0xff]
        %v457 = vld [vmem:[%s2 + $0xe0] sm:$0xff]
        %v458 = vld [vmem:[%s2 + $0xe8] sm:$0xff]
        %v459 = vld [vmem:[%s2 + $0xf0] sm:$0xff]
        %v460 = vld [vmem:[%s2 + $0xf8] sm:$0xff]
        %vm461 = vcmask 523264
        %v463 = vsel %vm461, %v429, 0
        %v466 = vsel %vm461, %v430, 0
        %v469 = vsel %vm461, %v431, 0
        %v472 = vsel %vm461, %v432, 0
        %v475 = vsel %vm461, %v433, 0
        %v478 = vsel %vm461, %v434, 0
        %v481 = vsel %vm461, %v435, 0
        %v484 = vsel %vm461, %v436, 0
        %v487 = vsel %vm461, %v437, 0
        %v490 = vsel %vm461, %v438, 0
        %v493 = vsel %vm461, %v439, 0
        %v496 = vsel %vm461, %v440, 0
        %v499 = vsel %vm461, %v441, 0
        %v502 = vsel %vm461, %v442, 0
        %v505 = vsel %vm461, %v443, 0
        %v508 = vsel %vm461, %v444, 0
        %v511 = vsel %vm461, %v445, 0
        %v514 = vsel %vm461, %v446, 0
        %v517 = vsel %vm461, %v447, 0
        %v520 = vsel %vm461, %v448, 0
        %v523 = vsel %vm461, %v449, 0
        %v526 = vsel %vm461, %v450, 0
        %v529 = vsel %vm461, %v451, 0
        %v532 = vsel %vm461, %v452, 0
        %v535 = vsel %vm461, %v453, 0
        %v538 = vsel %vm461, %v454, 0
        %v541 = vsel %vm461, %v455, 0
        %v544 = vsel %vm461, %v456, 0
        %v547 = vsel %vm461, %v457, 0
        %v550 = vsel %vm461, %v458, 0
        %v553 = vsel %vm461, %v459, 0
        %v556 = vsel %vm461, %v460, 0
        %558 = vmatprep.subr.mxu0 0.0
        %559 = vmatpush1.msra.mxu0 %v196
        %560 = vmatprep.subr.mxu0 0.0
        %561 = vmatpush1.msra.mxu0 %v197
        %562 = vmatprep.subr.mxu0 0.0
        %563 = vmatpush1.msra.mxu0 %v198
        %564 = vmatprep.subr.mxu0 0.0
        %565 = vmatpush1.msra.mxu0 %v199
        %566 = vmatprep.subr.mxu0 0.0
        %567 = vmatpush1.msra.mxu0 %v200
        %568 = vmatprep.subr.mxu0 0.0
        %569 = vmatpush1.msra.mxu0 %v201
        %570 = vmatprep.subr.mxu0 0.0
        %571 = vmatpush1.msra.mxu0 %v202
        %572 = vmatprep.subr.mxu0 0.0
        %573 = vmatpush1.msra.mxu0 %v203
        %574 = vmatprep.subr.mxu0 0.0
        %575 = vmatpush1.msra.mxu0 0.0
        %576 = vmatprep.subr.mxu0 0.0
        %577 = vmatpush1.msra.mxu0 0.0
        %578 = vmatprep.subr.mxu0 0.0
        %579 = vmatpush1.msra.mxu0 0.0
        %580 = vmatprep.subr.mxu0 0.0
        %581 = vmatpush1.msra.mxu0 0.0
        %582 = vmatprep.subr.mxu0 0.0
        %583 = vmatpush1.msra.mxu0 0.0
        %584 = vmatprep.subr.mxu0 0.0
        %585 = vmatpush1.msra.mxu0 0.0
        %586 = vmatprep.subr.mxu0 0.0
        %587 = vmatpush1.msra.mxu0 0.0
        %588 = vmatprep.subr.mxu0 0.0
        %589 = vmatpush1.msra.mxu0 0.0
        %590 = vmatprep.subr.mxu0 0.0
        %591 = vmatpush1.msra.mxu0 0.0
        %592 = vmatprep.subr.mxu0 0.0
        %593 = vmatpush1.msra.mxu0 0.0
        %594 = vmatprep.subr.mxu0 0.0
        %595 = vmatpush1.msra.mxu0 0.0
        %596 = vmatprep.subr.mxu0 0.0
        %597 = vmatpush1.msra.mxu0 0.0
        %598 = vmatprep.subr.mxu0 0.0
        %599 = vmatpush1.msra.mxu0 0.0
        %600 = vmatprep.subr.mxu0 0.0
        %601 = vmatpush1.msra.mxu0 0.0
        %602 = vmatprep.subr.mxu0 0.0
        %603 = vmatpush1.msra.mxu0 0.0
        %604 = vmatprep.subr.mxu0 0.0
        %605 = vmatpush1.msra.mxu0 0.0
        %606 = vmatprep.subr.mxu0 0.0
        %607 = vmatpush1.msra.mxu0 0.0
        %608 = vmatprep.subr.mxu0 0.0
        %609 = vmatpush1.msra.mxu0 0.0
        %610 = vmatprep.subr.mxu0 0.0
        %611 = vmatpush1.msra.mxu0 0.0
        %612 = vmatprep.subr.mxu0 0.0
        %613 = vmatpush1.msra.mxu0 0.0
        %614 = vmatprep.subr.mxu0 0.0
        %615 = vmatpush1.msra.mxu0 0.0
        %616 = vmatprep.subr.mxu0 0.0
        %617 = vmatpush1.msra.mxu0 0.0
        %618 = vmatprep.subr.mxu0 0.0
        %619 = vmatpush1.msra.mxu0 0.0
        %620 = vmatprep.subr.mxu0 0.0
        %621 = vmatpush1.msra.mxu0 0.0
        %622 = vmatprep.mubr.f32.mxu0 0.0
        %623 = vmatmul.mubr.f32.gmra.mrb[0].mxu0 %v463
        %v624 = vpop.f32.mrb[0].mxu0
        %v625 = vadd.f32 0.0, %v624
        %v626 = vpop.f32.mrb[0].mxu0
        %627 = vmatprep.mubr.f32.mxu0 0.0
        %628 = vmatmul.mubr.f32.gmra.mrb[0].mxu0 %v466
        %v629 = vpop.f32.mrb[0].mxu0
        %v630 = vadd.f32 0.0, %v629
        %v631 = vpop.f32.mrb[0].mxu0
        %632 = vmatprep.mubr.f32.mxu0 0.0
        %633 = vmatmul.mubr.f32.gmra.mrb[0].mxu0 %v469
        %v634 = vpop.f32.mrb[0].mxu0
        %v635 = vadd.f32 0.0, %v634
        %v636 = vpop.f32.mrb[0].mxu0
        %637 = vmatprep.mubr.f32.mxu0 0.0
        %638 = vmatmul.mubr.f32.gmra.mrb[0].mxu0 %v472
        %v639 = vpop.f32.mrb[0].mxu0
        %v640 = vadd.f32 0.0, %v639
        %v641 = vpop.f32.mrb[0].mxu0
        %642 = vmatprep.mubr.f32.mxu0 0.0
        %643 = vmatmul.mubr.f32.gmra.mrb[0].mxu0 %v475
        %v644 = vpop.f32.mrb[0].mxu0
        %v645 = vadd.f32 0.0, %v644
        %v646 = vpop.f32.mrb[0].mxu0
        %647 = vmatprep.mubr.f32.mxu0 0.0
        %648 = vmatmul.mubr.f32.gmra.mrb[0].mxu0 %v478
        %v649 = vpop.f32.mrb[0].mxu0
        %v650 = vadd.f32 0.0, %v649
        %v651 = vpop.f32.mrb[0].mxu0
        %652 = vmatprep.mubr.f32.mxu0 0.0
        %653 = vmatmul.mubr.f32.gmra.mrb[0].mxu0 %v481
        %v654 = vpop.f32.mrb[0].mxu0
        %v655 = vadd.f32 0.0, %v654
        %v656 = vpop.f32.mrb[0].mxu0
        %657 = vmatprep.mubr.f32.mxu0 0.0
        %658 = vmatmul.mubr.f32.gmra.mrb[0].mxu0 %v484
        %v659 = vpop.f32.mrb[0].mxu0
        %v660 = vadd.f32 0.0, %v659
        %v661 = vpop.f32.mrb[0].mxu0
        %662 = vmatprep.mubr.f32.mxu0 0.0
        %663 = vmatmul.mubr.f32.gmra.mrb[0].mxu0 %v487
        %v664 = vpop.f32.mrb[0].mxu0
        %v665 = vadd.f32 0.0, %v664
        %v666 = vpop.f32.mrb[0].mxu0
        %667 = vmatprep.mubr.f32.mxu0 0.0
        %668 = vmatmul.mubr.f32.gmra.mrb[0].mxu0 %v490
        %v669 = vpop.f32.mrb[0].mxu0
        %v670 = vadd.f32 0.0, %v669
        %v671 = vpop.f32.mrb[0].mxu0
        %672 = vmatprep.mubr.f32.mxu0 0.0
        %673 = vmatmul.mubr.f32.gmra.mrb[0].mxu0 %v493
        %v674 = vpop.f32.mrb[0].mxu0
        %v675 = vadd.f32 0.0, %v674
        %v676 = vpop.f32.mrb[0].mxu0
        %677 = vmatprep.mubr.f32.mxu0 0.0
        %678 = vmatmul.mubr.f32.gmra.mrb[0].mxu0 %v496
        %v679 = vpop.f32.mrb[0].mxu0
        %v680 = vadd.f32 0.0, %v679
        %v681 = vpop.f32.mrb[0].mxu0
        %682 = vmatprep.mubr.f32.mxu0 0.0
        %683 = vmatmul.mubr.f32.gmra.mrb[0].mxu0 %v499
        %v684 = vpop.f32.mrb[0].mxu0
        %v685 = vadd.f32 0.0, %v684
        %v686 = vpop.f32.mrb[0].mxu0
        %687 = vmatprep.mubr.f32.mxu0 0.0
        %688 = vmatmul.mubr.f32.gmra.mrb[0].mxu0 %v502
        %v689 = vpop.f32.mrb[0].mxu0
        %v690 = vadd.f32 0.0, %v689
        %v691 = vpop.f32.mrb[0].mxu0
        %692 = vmatprep.mubr.f32.mxu0 0.0
        %693 = vmatmul.mubr.f32.gmra.mrb[0].mxu0 %v505
        %v694 = vpop.f32.mrb[0].mxu0
        %v695 = vadd.f32 0.0, %v694
        %v696 = vpop.f32.mrb[0].mxu0
        %697 = vmatprep.mubr.f32.mxu0 0.0
        %698 = vmatmul.mubr.f32.gmra.mrb[0].mxu0 %v508
        %v699 = vpop.f32.mrb[0].mxu0
        %v700 = vadd.f32 0.0, %v699
        %v701 = vpop.f32.mrb[0].mxu0
        %702 = vmatprep.mubr.f32.mxu0 0.0
        %703 = vmatmul.mubr.f32.gmra.mrb[0].mxu0 %v511
        %v704 = vpop.f32.mrb[0].mxu0
        %v705 = vadd.f32 0.0, %v704
        %v706 = vpop.f32.mrb[0].mxu0
        %707 = vmatprep.mubr.f32.mxu0 0.0
        %708 = vmatmul.mubr.f32.gmra.mrb[0].mxu0 %v514
        %v709 = vpop.f32.mrb[0].mxu0
        %v710 = vadd.f32 0.0, %v709
        %v711 = vpop.f32.mrb[0].mxu0
        %712 = vmatprep.mubr.f32.mxu0 0.0
        %713 = vmatmul.mubr.f32.gmra.mrb[0].mxu0 %v517
        %v714 = vpop.f32.mrb[0].mxu0
        %v715 = vadd.f32 0.0, %v714
        %v716 = vpop.f32.mrb[0].mxu0
        %717 = vmatprep.mubr.f32.mxu0 0.0
        %718 = vmatmul.mubr.f32.gmra.mrb[0].mxu0 %v520
        %v719 = vpop.f32.mrb[0].mxu0
        %v720 = vadd.f32 0.0, %v719
        %v721 = vpop.f32.mrb[0].mxu0
        %722 = vmatprep.mubr.f32.mxu0 0.0
        %723 = vmatmul.mubr.f32.gmra.mrb[0].mxu0 %v523
        %v724 = vpop.f32.mrb[0].mxu0
        %v725 = vadd.f32 0.0, %v724
        %v726 = vpop.f32.mrb[0].mxu0
        %727 = vmatprep.mubr.f32.mxu0 0.0
        %728 = vmatmul.mubr.f32.gmra.mrb[0].mxu0 %v526
        %v729 = vpop.f32.mrb[0].mxu0
        %v730 = vadd.f32 0.0, %v729
        %v731 = vpop.f32.mrb[0].mxu0
        %732 = vmatprep.mubr.f32.mxu0 0.0
        %733 = vmatmul.mubr.f32.gmra.mrb[0].mxu0 %v529
        %v734 = vpop.f32.mrb[0].mxu0
        %v735 = vadd.f32 0.0, %v734
        %v736 = vpop.f32.mrb[0].mxu0
        %737 = vmatprep.mubr.f32.mxu0 0.0
        %738 = vmatmul.mubr.f32.gmra.mrb[0].mxu0 %v532
        %v739 = vpop.f32.mrb[0].mxu0
        %v740 = vadd.f32 0.0, %v739
        %v741 = vpop.f32.mrb[0].mxu0
        %742 = vmatprep.mubr.f32.mxu0 0.0
        %743 = vmatmul.mubr.f32.gmra.mrb[0].mxu0 %v535
        %v744 = vpop.f32.mrb[0].mxu0
        %v745 = vadd.f32 0.0, %v744
        %v746 = vpop.f32.mrb[0].mxu0
        %747 = vmatprep.mubr.f32.mxu0 0.0
        %748 = vmatmul.mubr.f32.gmra.mrb[0].mxu0 %v538
        %v749 = vpop.f32.mrb[0].mxu0
        %v750 = vadd.f32 0.0, %v749
        %v751 = vpop.f32.mrb[0].mxu0
        %752 = vmatprep.mubr.f32.mxu0 0.0
        %753 = vmatmul.mubr.f32.gmra.mrb[0].mxu0 %v541
        %v754 = vpop.f32.mrb[0].mxu0
        %v755 = vadd.f32 0.0, %v754
        %v756 = vpop.f32.mrb[0].mxu0
        %757 = vmatprep.mubr.f32.mxu0 0.0
        %758 = vmatmul.mubr.f32.gmra.mrb[0].mxu0 %v544
        %v759 = vpop.f32.mrb[0].mxu0
        %v760 = vadd.f32 0.0, %v759
        %v761 = vpop.f32.mrb[0].mxu0
        %762 = vmatprep.mubr.f32.mxu0 0.0
        %763 = vmatmul.mubr.f32.gmra.mrb[0].mxu0 %v547
        %v764 = vpop.f32.mrb[0].mxu0
        %v765 = vadd.f32 0.0, %v764
        %v766 = vpop.f32.mrb[0].mxu0
        %767 = vmatprep.mubr.f32.mxu0 0.0
        %768 = vmatmul.mubr.f32.gmra.mrb[0].mxu0 %v550
        %v769 = vpop.f32.mrb[0].mxu0
        %v770 = vadd.f32 0.0, %v769
        %v771 = vpop.f32.mrb[0].mxu0
        %772 = vmatprep.mubr.f32.mxu0 0.0
        %773 = vmatmul.mubr.f32.gmra.mrb[0].mxu0 %v553
        %v774 = vpop.f32.mrb[0].mxu0
        %v775 = vadd.f32 0.0, %v774
        %v776 = vpop.f32.mrb[0].mxu0
        %777 = vmatprep.mubr.f32.mxu0 0.0
        %778 = vmatmul.mubr.f32.gmra.mrb[0].mxu0 %v556
        %v779 = vpop.f32.mrb[0].mxu0
        %v780 = vadd.f32 0.0, %v779
        %v781 = vpop.f32.mrb[0].mxu0
        %782 = vdwg.mxu0
        %v783 = vld [vmem:[#allocation2] sm:$0xff]
        %v784 = vld [vmem:[#allocation2 + $0x8] sm:$0xff]
        %v785 = vld [vmem:[#allocation2 + $0x10] sm:$0xff]
        %v786 = vld [vmem:[#allocation2 + $0x18] sm:$0xff]
        %v787 = vld [vmem:[#allocation2 + $0x20] sm:$0xff]
        %v788 = vld [vmem:[#allocation2 + $0x28] sm:$0xff]
        %v789 = vld [vmem:[#allocation2 + $0x30] sm:$0xff]
        %v790 = vld [vmem:[#allocation2 + $0x38] sm:$0xff]
        %v791 = vld [vmem:[#allocation2 + $0x40] sm:$0xff]
        %v792 = vld [vmem:[#allocation2 + $0x48] sm:$0xff]
        %v793 = vld [vmem:[#allocation2 + $0x50] sm:$0xff]
        %v794 = vld [vmem:[#allocation2 + $0x58] sm:$0xff]
        %v795 = vld [vmem:[#allocation2 + $0x60] sm:$0xff]
        %v796 = vld [vmem:[#allocation2 + $0x68] sm:$0xff]
        %v797 = vld [vmem:[#allocation2 + $0x70] sm:$0xff]
        %v798 = vld [vmem:[#allocation2 + $0x78] sm:$0xff]
        %v799 = vld [vmem:[#allocation2 + $0x80] sm:$0xff]
        %v800 = vld [vmem:[#allocation2 + $0x88] sm:$0xff]
        %v801 = vld [vmem:[#allocation2 + $0x90] sm:$0xff]
        %v802 = vld [vmem:[#allocation2 + $0x98] sm:$0xff]
        %v803 = vld [vmem:[#allocation2 + $0xa0] sm:$0xff]
        %v804 = vld [vmem:[#allocation2 + $0xa8] sm:$0xff]
        %v805 = vld [vmem:[#allocation2 + $0xb0] sm:$0xff]
        %v806 = vld [vmem:[#allocation2 + $0xb8] sm:$0xff]
        %v807 = vld [vmem:[#allocation2 + $0xc0] sm:$0xff]
        %v808 = vld [vmem:[#allocation2 + $0xc8] sm:$0xff]
        %v809 = vld [vmem:[#allocation2 + $0xd0] sm:$0xff]
        %v810 = vld [vmem:[#allocation2 + $0xd8] sm:$0xff]
        %v811 = vld [vmem:[#allocation2 + $0xe0] sm:$0xff]
        %v812 = vld [vmem:[#allocation2 + $0xe8] sm:$0xff]
        %v813 = vld [vmem:[#allocation2 + $0xf0] sm:$0xff]
        %v814 = vld [vmem:[#allocation2 + $0xf8] sm:$0xff]
        %v815 = vld [vmem:[%s1] sm:$0xff]
        %v816 = vld [vmem:[%s1 + $0x8] sm:$0xff]
        %vm817 = vcmask 130048
        %v819 = vsel %vm817, %v625, 0
        %v822 = vsel %vm817, %v630, 0
        %v825 = vsel %vm817, %v635, 0
        %v828 = vsel %vm817, %v640, 0
        %v831 = vsel %vm817, %v645, 0
        %v834 = vsel %vm817, %v650, 0
        %v837 = vsel %vm817, %v655, 0
        %v840 = vsel %vm817, %v660, 0
        %v843 = vsel %vm817, %v665, 0
        %v846 = vsel %vm817, %v670, 0
        %v849 = vsel %vm817, %v675, 0
        %v852 = vsel %vm817, %v680, 0
        %v855 = vsel %vm817, %v685, 0
        %v858 = vsel %vm817, %v690, 0
        %v861 = vsel %vm817, %v695, 0
        %v864 = vsel %vm817, %v700, 0
        %v867 = vsel %vm817, %v705, 0
        %v870 = vsel %vm817, %v710, 0
        %v873 = vsel %vm817, %v715, 0
        %v876 = vsel %vm817, %v720, 0
        %v879 = vsel %vm817, %v725, 0
        %v882 = vsel %vm817, %v730, 0
        %v885 = vsel %vm817, %v735, 0
        %v888 = vsel %vm817, %v740, 0
        %v891 = vsel %vm817, %v745, 0
        %v894 = vsel %vm817, %v750, 0
        %v897 = vsel %vm817, %v755, 0
        %v900 = vsel %vm817, %v760, 0
        %v903 = vsel %vm817, %v765, 0
        %v906 = vsel %vm817, %v770, 0
        %v909 = vsel %vm817, %v775, 0
        %v912 = vsel %vm817, %v780, 0
        %914 = vmatprep.subr.mxu0 0.0
        %915 = vmatpush1.msra.mxu0 %v815
        %916 = vmatprep.subr.mxu0 0.0
        %917 = vmatpush1.msra.mxu0 %v816
        %918 = vmatprep.subr.mxu0 0.0
        %919 = vmatpush1.msra.mxu0 0.0
        %920 = vmatprep.subr.mxu0 0.0
        %921 = vmatpush1.msra.mxu0 0.0
        %922 = vmatprep.subr.mxu0 0.0
        %923 = vmatpush1.msra.mxu0 0.0
        %924 = vmatprep.subr.mxu0 0.0
        %925 = vmatpush1.msra.mxu0 0.0
        %926 = vmatprep.subr.mxu0 0.0
        %927 = vmatpush1.msra.mxu0 0.0
        %928 = vmatprep.subr.mxu0 0.0
        %929 = vmatpush1.msra.mxu0 0.0
        %930 = vmatprep.subr.mxu0 0.0
        %931 = vmatpush1.msra.mxu0 0.0
        %932 = vmatprep.subr.mxu0 0.0
        %933 = vmatpush1.msra.mxu0 0.0
        %934 = vmatprep.subr.mxu0 0.0
        %935 = vmatpush1.msra.mxu0 0.0
        %936 = vmatprep.subr.mxu0 0.0
        %937 = vmatpush1.msra.mxu0 0.0
        %938 = vmatprep.subr.mxu0 0.0
        %939 = vmatpush1.msra.mxu0 0.0
        %940 = vmatprep.subr.mxu0 0.0
        %941 = vmatpush1.msra.mxu0 0.0
        %942 = vmatprep.subr.mxu0 0.0
        %943 = vmatpush1.msra.mxu0 0.0
        %944 = vmatprep.subr.mxu0 0.0
        %945 = vmatpush1.msra.mxu0 0.0
        %946 = vmatprep.subr.mxu0 0.0
        %947 = vmatpush1.msra.mxu0 0.0
        %948 = vmatprep.subr.mxu0 0.0
        %949 = vmatpush1.msra.mxu0 0.0
        %950 = vmatprep.subr.mxu0 0.0
        %951 = vmatpush1.msra.mxu0 0.0
        %952 = vmatprep.subr.mxu0 0.0
        %953 = vmatpush1.msra.mxu0 0.0
        %954 = vmatprep.subr.mxu0 0.0
        %955 = vmatpush1.msra.mxu0 0.0
        %956 = vmatprep.subr.mxu0 0.0
        %957 = vmatpush1.msra.mxu0 0.0
        %958 = vmatprep.subr.mxu0 0.0
        %959 = vmatpush1.msra.mxu0 0.0
        %960 = vmatprep.subr.mxu0 0.0
        %961 = vmatpush1.msra.mxu0 0.0
        %962 = vmatprep.subr.mxu0 0.0
        %963 = vmatpush1.msra.mxu0 0.0
        %964 = vmatprep.subr.mxu0 0.0
        %965 = vmatpush1.msra.mxu0 0.0
        %966 = vmatprep.subr.mxu0 0.0
        %967 = vmatpush1.msra.mxu0 0.0
        %968 = vmatprep.subr.mxu0 0.0
        %969 = vmatpush1.msra.mxu0 0.0
        %970 = vmatprep.subr.mxu0 0.0
        %971 = vmatpush1.msra.mxu0 0.0
        %972 = vmatprep.subr.mxu0 0.0
        %973 = vmatpush1.msra.mxu0 0.0
        %974 = vmatprep.subr.mxu0 0.0
        %975 = vmatpush1.msra.mxu0 0.0
        %976 = vmatprep.subr.mxu0 0.0
        %977 = vmatpush1.msra.mxu0 0.0
        %978 = vmatprep.mubr.f32.mxu0 0.0
        %979 = vmatmul.mubr.f32.gmra.mrb[0].mxu0 %v819
        %v980 = vpop.f32.mrb[0].mxu0
        %v981 = vadd.f32 0.0, %v980
        %v982 = vpop.f32.mrb[0].mxu0
        %983 = vmatprep.mubr.f32.mxu0 0.0
        %984 = vmatmul.mubr.f32.gmra.mrb[0].mxu0 %v822
        %v985 = vpop.f32.mrb[0].mxu0
        %v986 = vadd.f32 0.0, %v985
        %v987 = vpop.f32.mrb[0].mxu0
        %988 = vmatprep.mubr.f32.mxu0 0.0
        %989 = vmatmul.mubr.f32.gmra.mrb[0].mxu0 %v825
        %v990 = vpop.f32.mrb[0].mxu0
        %v991 = vadd.f32 0.0, %v990
        %v992 = vpop.f32.mrb[0].mxu0
        %993 = vmatprep.mubr.f32.mxu0 0.0
        %994 = vmatmul.mubr.f32.gmra.mrb[0].mxu0 %v828
        %v995 = vpop.f32.mrb[0].mxu0
        %v996 = vadd.f32 0.0, %v995
        %v997 = vpop.f32.mrb[0].mxu0
        %998 = vmatprep.mubr.f32.mxu0 0.0
        %999 = vmatmul.mubr.f32.gmra.mrb[0].mxu0 %v831
        %v1000 = vpop.f32.mrb[0].mxu0
        %v1001 = vadd.f32 0.0, %v1000
        %v1002 = vpop.f32.mrb[0].mxu0
        %1003 = vmatprep.mubr.f32.mxu0 0.0
        %1004 = vmatmul.mubr.f32.gmra.mrb[0].mxu0 %v834
        %v1005 = vpop.f32.mrb[0].mxu0
        %v1006 = vadd.f32 0.0, %v1005
        %v1007 = vpop.f32.mrb[0].mxu0
        %1008 = vmatprep.mubr.f32.mxu0 0.0
        %1009 = vmatmul.mubr.f32.gmra.mrb[0].mxu0 %v837
        %v1010 = vpop.f32.mrb[0].mxu0
        %v1011 = vadd.f32 0.0, %v1010
        %v1012 = vpop.f32.mrb[0].mxu0
        %1013 = vmatprep.mubr.f32.mxu0 0.0
        %1014 = vmatmul.mubr.f32.gmra.mrb[0].mxu0 %v840
        %v1015 = vpop.f32.mrb[0].mxu0
        %v1016 = vadd.f32 0.0, %v1015
        %v1017 = vpop.f32.mrb[0].mxu0
        %1018 = vmatprep.mubr.f32.mxu0 0.0
        %1019 = vmatmul.mubr.f32.gmra.mrb[0].mxu0 %v843
        %v1020 = vpop.f32.mrb[0].mxu0
        %v1021 = vadd.f32 0.0, %v1020
        %v1022 = vpop.f32.mrb[0].mxu0
        %1023 = vmatprep.mubr.f32.mxu0 0.0
        %1024 = vmatmul.mubr.f32.gmra.mrb[0].mxu0 %v846
        %v1025 = vpop.f32.mrb[0].mxu0
        %v1026 = vadd.f32 0.0, %v1025
        %v1027 = vpop.f32.mrb[0].mxu0
        %1028 = vmatprep.mubr.f32.mxu0 0.0
        %1029 = vmatmul.mubr.f32.gmra.mrb[0].mxu0 %v849
        %v1030 = vpop.f32.mrb[0].mxu0
        %v1031 = vadd.f32 0.0, %v1030
        %v1032 = vpop.f32.mrb[0].mxu0
        %1033 = vmatprep.mubr.f32.mxu0 0.0
        %1034 = vmatmul.mubr.f32.gmra.mrb[0].mxu0 %v852
        %v1035 = vpop.f32.mrb[0].mxu0
        %v1036 = vadd.f32 0.0, %v1035
        %v1037 = vpop.f32.mrb[0].mxu0
        %1038 = vmatprep.mubr.f32.mxu0 0.0
        %1039 = vmatmul.mubr.f32.gmra.mrb[0].mxu0 %v855
        %v1040 = vpop.f32.mrb[0].mxu0
        %v1041 = vadd.f32 0.0, %v1040
        %v1042 = vpop.f32.mrb[0].mxu0
        %1043 = vmatprep.mubr.f32.mxu0 0.0
        %1044 = vmatmul.mubr.f32.gmra.mrb[0].mxu0 %v858
        %v1045 = vpop.f32.mrb[0].mxu0
        %v1046 = vadd.f32 0.0, %v1045
        %v1047 = vpop.f32.mrb[0].mxu0
        %1048 = vmatprep.mubr.f32.mxu0 0.0
        %1049 = vmatmul.mubr.f32.gmra.mrb[0].mxu0 %v861
        %v1050 = vpop.f32.mrb[0].mxu0
        %v1051 = vadd.f32 0.0, %v1050
        %v1052 = vpop.f32.mrb[0].mxu0
        %1053 = vmatprep.mubr.f32.mxu0 0.0
        %1054 = vmatmul.mubr.f32.gmra.mrb[0].mxu0 %v864
        %v1055 = vpop.f32.mrb[0].mxu0
        %v1056 = vadd.f32 0.0, %v1055
        %v1057 = vpop.f32.mrb[0].mxu0
        %1058 = vmatprep.mubr.f32.mxu0 0.0
        %1059 = vmatmul.mubr.f32.gmra.mrb[0].mxu0 %v867
        %v1060 = vpop.f32.mrb[0].mxu0
        %v1061 = vadd.f32 0.0, %v1060
        %v1062 = vpop.f32.mrb[0].mxu0
        %1063 = vmatprep.mubr.f32.mxu0 0.0
        %1064 = vmatmul.mubr.f32.gmra.mrb[0].mxu0 %v870
        %v1065 = vpop.f32.mrb[0].mxu0
        %v1066 = vadd.f32 0.0, %v1065
        %v1067 = vpop.f32.mrb[0].mxu0
        %1068 = vmatprep.mubr.f32.mxu0 0.0
        %1069 = vmatmul.mubr.f32.gmra.mrb[0].mxu0 %v873
        %v1070 = vpop.f32.mrb[0].mxu0
        %v1071 = vadd.f32 0.0, %v1070
        %v1072 = vpop.f32.mrb[0].mxu0
        %1073 = vmatprep.mubr.f32.mxu0 0.0
        %1074 = vmatmul.mubr.f32.gmra.mrb[0].mxu0 %v876
        %v1075 = vpop.f32.mrb[0].mxu0
        %v1076 = vadd.f32 0.0, %v1075
        %v1077 = vpop.f32.mrb[0].mxu0
        %1078 = vmatprep.mubr.f32.mxu0 0.0
        %1079 = vmatmul.mubr.f32.gmra.mrb[0].mxu0 %v879
        %v1080 = vpop.f32.mrb[0].mxu0
        %v1081 = vadd.f32 0.0, %v1080
        %v1082 = vpop.f32.mrb[0].mxu0
        %1083 = vmatprep.mubr.f32.mxu0 0.0
        %1084 = vmatmul.mubr.f32.gmra.mrb[0].mxu0 %v882
        %v1085 = vpop.f32.mrb[0].mxu0
        %v1086 = vadd.f32 0.0, %v1085
        %v1087 = vpop.f32.mrb[0].mxu0
        %1088 = vmatprep.mubr.f32.mxu0 0.0
        %1089 = vmatmul.mubr.f32.gmra.mrb[0].mxu0 %v885
        %v1090 = vpop.f32.mrb[0].mxu0
        %v1091 = vadd.f32 0.0, %v1090
        %v1092 = vpop.f32.mrb[0].mxu0
        %1093 = vmatprep.mubr.f32.mxu0 0.0
        %1094 = vmatmul.mubr.f32.gmra.mrb[0].mxu0 %v888
        %v1095 = vpop.f32.mrb[0].mxu0
        %v1096 = vadd.f32 0.0, %v1095
        %v1097 = vpop.f32.mrb[0].mxu0
        %1098 = vmatprep.mubr.f32.mxu0 0.0
        %1099 = vmatmul.mubr.f32.gmra.mrb[0].mxu0 %v891
        %v1100 = vpop.f32.mrb[0].mxu0
        %v1101 = vadd.f32 0.0, %v1100
        %v1102 = vpop.f32.mrb[0].mxu0
        %1103 = vmatprep.mubr.f32.mxu0 0.0
        %1104 = vmatmul.mubr.f32.gmra.mrb[0].mxu0 %v894
        %v1105 = vpop.f32.mrb[0].mxu0
        %v1106 = vadd.f32 0.0, %v1105
        %v1107 = vpop.f32.mrb[0].mxu0
        %1108 = vmatprep.mubr.f32.mxu0 0.0
        %1109 = vmatmul.mubr.f32.gmra.mrb[0].mxu0 %v897
        %v1110 = vpop.f32.mrb[0].mxu0
        %v1111 = vadd.f32 0.0, %v1110
        %v1112 = vpop.f32.mrb[0].mxu0
        %1113 = vmatprep.mubr.f32.mxu0 0.0
        %1114 = vmatmul.mubr.f32.gmra.mrb[0].mxu0 %v900
        %v1115 = vpop.f32.mrb[0].mxu0
        %v1116 = vadd.f32 0.0, %v1115
        %v1117 = vpop.f32.mrb[0].mxu0
        %1118 = vmatprep.mubr.f32.mxu0 0.0
        %1119 = vmatmul.mubr.f32.gmra.mrb[0].mxu0 %v903
        %v1120 = vpop.f32.mrb[0].mxu0
        %v1121 = vadd.f32 0.0, %v1120
        %v1122 = vpop.f32.mrb[0].mxu0
        %1123 = vmatprep.mubr.f32.mxu0 0.0
        %1124 = vmatmul.mubr.f32.gmra.mrb[0].mxu0 %v906
        %v1125 = vpop.f32.mrb[0].mxu0
        %v1126 = vadd.f32 0.0, %v1125
        %v1127 = vpop.f32.mrb[0].mxu0
        %1128 = vmatprep.mubr.f32.mxu0 0.0
        %1129 = vmatmul.mubr.f32.gmra.mrb[0].mxu0 %v909
        %v1130 = vpop.f32.mrb[0].mxu0
        %v1131 = vadd.f32 0.0, %v1130
        %v1132 = vpop.f32.mrb[0].mxu0
        %1133 = vmatprep.mubr.f32.mxu0 0.0
        %1134 = vmatmul.mubr.f32.gmra.mrb[0].mxu0 %v912
        %v1135 = vpop.f32.mrb[0].mxu0
        %v1136 = vadd.f32 0.0, %v1135
        %v1137 = vpop.f32.mrb[0].mxu0
        %1138 = vdwg.mxu0
        %v1139 = vadd.f32 %v783, %v981
        %v1140 = vadd.f32 %v784, %v986
        %v1141 = vadd.f32 %v785, %v991
        %v1142 = vadd.f32 %v786, %v996
        %v1143 = vadd.f32 %v787, %v1001
        %v1144 = vadd.f32 %v788, %v1006
        %v1145 = vadd.f32 %v789, %v1011
        %v1146 = vadd.f32 %v790, %v1016
        %v1147 = vadd.f32 %v791, %v1021
        %v1148 = vadd.f32 %v792, %v1026
        %v1149 = vadd.f32 %v793, %v1031
        %v1150 = vadd.f32 %v794, %v1036
        %v1151 = vadd.f32 %v795, %v1041
        %v1152 = vadd.f32 %v796, %v1046
        %v1153 = vadd.f32 %v797, %v1051
        %v1154 = vadd.f32 %v798, %v1056
        %v1155 = vadd.f32 %v799, %v1061
        %v1156 = vadd.f32 %v800, %v1066
        %v1157 = vadd.f32 %v801, %v1071
        %v1158 = vadd.f32 %v802, %v1076
        %v1159 = vadd.f32 %v803, %v1081
        %v1160 = vadd.f32 %v804, %v1086
        %v1161 = vadd.f32 %v805, %v1091
        %v1162 = vadd.f32 %v806, %v1096
        %v1163 = vadd.f32 %v807, %v1101
        %v1164 = vadd.f32 %v808, %v1106
        %v1165 = vadd.f32 %v809, %v1111
        %v1166 = vadd.f32 %v810, %v1116
        %v1167 = vadd.f32 %v811, %v1121
        %v1168 = vadd.f32 %v812, %v1126
        %v1169 = vadd.f32 %v813, %v1131
        %v1170 = vadd.f32 %v814, %v1136
        %1171 = vst.msk [vmem:[#allocation2] sm:$0xff] %vm396, %v1139
        %1172 = vst.msk [vmem:[#allocation2 + $0x8] sm:$0xff] %vm396, %v1140
        %1173 = vst.msk [vmem:[#allocation2 + $0x10] sm:$0xff] %vm396, %v1141
        %1174 = vst.msk [vmem:[#allocation2 + $0x18] sm:$0xff] %vm396, %v1142
        %1175 = vst.msk [vmem:[#allocation2 + $0x20] sm:$0xff] %vm396, %v1143
        %1176 = vst.msk [vmem:[#allocation2 + $0x28] sm:$0xff] %vm396, %v1144
        %1177 = vst.msk [vmem:[#allocation2 + $0x30] sm:$0xff] %vm396, %v1145
        %1178 = vst.msk [vmem:[#allocation2 + $0x38] sm:$0xff] %vm396, %v1146
        %1179 = vst.msk [vmem:[#allocation2 + $0x40] sm:$0xff] %vm396, %v1147
        %1180 = vst.msk [vmem:[#allocation2 + $0x48] sm:$0xff] %vm396, %v1148
        %1181 = vst.msk [vmem:[#allocation2 + $0x50] sm:$0xff] %vm396, %v1149
        %1182 = vst.msk [vmem:[#allocation2 + $0x58] sm:$0xff] %vm396, %v1150
        %1183 = vst.msk [vmem:[#allocation2 + $0x60] sm:$0xff] %vm396, %v1151
        %1184 = vst.msk [vmem:[#allocation2 + $0x68] sm:$0xff] %vm396, %v1152
        %1185 = vst.msk [vmem:[#allocation2 + $0x70] sm:$0xff] %vm396, %v1153
        %1186 = vst.msk [vmem:[#allocation2 + $0x78] sm:$0xff] %vm396, %v1154
        %1187 = vst.msk [vmem:[#allocation2 + $0x80] sm:$0xff] %vm396, %v1155
        %1188 = vst.msk [vmem:[#allocation2 + $0x88] sm:$0xff] %vm396, %v1156
        %1189 = vst.msk [vmem:[#allocation2 + $0x90] sm:$0xff] %vm396, %v1157
        %1190 = vst.msk [vmem:[#allocation2 + $0x98] sm:$0xff] %vm396, %v1158
        %1191 = vst.msk [vmem:[#allocation2 + $0xa0] sm:$0xff] %vm396, %v1159
        %1192 = vst.msk [vmem:[#allocation2 + $0xa8] sm:$0xff] %vm396, %v1160
        %1193 = vst.msk [vmem:[#allocation2 + $0xb0] sm:$0xff] %vm396, %v1161
        %1194 = vst.msk [vmem:[#allocation2 + $0xb8] sm:$0xff] %vm396, %v1162
        %1195 = vst.msk [vmem:[#allocation2 + $0xc0] sm:$0xff] %vm396, %v1163
        %1196 = vst.msk [vmem:[#allocation2 + $0xc8] sm:$0xff] %vm396, %v1164
        %1197 = vst.msk [vmem:[#allocation2 + $0xd0] sm:$0xff] %vm396, %v1165
        %1198 = vst.msk [vmem:[#allocation2 + $0xd8] sm:$0xff] %vm396, %v1166
        %1199 = vst.msk [vmem:[#allocation2 + $0xe0] sm:$0xff] %vm396, %v1167
        %1200 = vst.msk [vmem:[#allocation2 + $0xe8] sm:$0xff] %vm396, %v1168
        %1201 = vst.msk [vmem:[#allocation2 + $0xf0] sm:$0xff] %vm396, %v1169
        %1202 = vst.msk [vmem:[#allocation2 + $0xf8] sm:$0xff] %vm396, %v1170
        %s1203 = scalar_lea.vmem %s2, 256
        %v1204 = vld [vmem:[%s1203] sm:$0xff]
        %v1205 = vld [vmem:[%s1203 + $0x8] sm:$0xff]
        %v1206 = vld [vmem:[%s1203 + $0x10] sm:$0xff]
        %v1207 = vld [vmem:[%s1203 + $0x18] sm:$0xff]
        %v1208 = vld [vmem:[%s1203 + $0x20] sm:$0xff]
        %v1209 = vld [vmem:[%s1203 + $0x28] sm:$0xff]
        %v1210 = vld [vmem:[%s1203 + $0x30] sm:$0xff]
        %v1211 = vld [vmem:[%s1203 + $0x38] sm:$0xff]
        %v1212 = vld [vmem:[%s1203 + $0x40] sm:$0xff]
        %v1213 = vld [vmem:[%s1203 + $0x48] sm:$0xff]
        %v1214 = vld [vmem:[%s1203 + $0x50] sm:$0xff]
        %v1215 = vld [vmem:[%s1203 + $0x58] sm:$0xff]
        %v1216 = vld [vmem:[%s1203 + $0x60] sm:$0xff]
        %v1217 = vld [vmem:[%s1203 + $0x68] sm:$0xff]
        %v1218 = vld [vmem:[%s1203 + $0x70] sm:$0xff]
        %v1219 = vld [vmem:[%s1203 + $0x78] sm:$0xff]
        %v1220 = vld [vmem:[%s1203 + $0x80] sm:$0xff]
        %v1221 = vld [vmem:[%s1203 + $0x88] sm:$0xff]
        %v1222 = vld [vmem:[%s1203 + $0x90] sm:$0xff]
        %v1223 = vld [vmem:[%s1203 + $0x98] sm:$0xff]
        %v1224 = vld [vmem:[%s1203 + $0xa0] sm:$0xff]
        %v1225 = vld [vmem:[%s1203 + $0xa8] sm:$0xff]
        %v1226 = vld [vmem:[%s1203 + $0xb0] sm:$0xff]
        %v1227 = vld [vmem:[%s1203 + $0xb8] sm:$0xff]
        %v1228 = vld [vmem:[%s1203 + $0xc0] sm:$0xff]
        %v1229 = vld [vmem:[%s1203 + $0xc8] sm:$0xff]
        %v1230 = vld [vmem:[%s1203 + $0xd0] sm:$0xff]
        %v1231 = vld [vmem:[%s1203 + $0xd8] sm:$0xff]
        %v1232 = vld [vmem:[%s1203 + $0xe0] sm:$0xff]
        %v1233 = vld [vmem:[%s1203 + $0xe8] sm:$0xff]
        %v1234 = vld [vmem:[%s1203 + $0xf0] sm:$0xff]
        %v1235 = vld [vmem:[%s1203 + $0xf8] sm:$0xff]
        %v1237 = vsel %vm461, %v1204, 0
        %v1240 = vsel %vm461, %v1205, 0
        %v1243 = vsel %vm461, %v1206, 0
        %v1246 = vsel %vm461, %v1207, 0
        %v1249 = vsel %vm461, %v1208, 0
        %v1252 = vsel %vm461, %v1209, 0
        %v1255 = vsel %vm461, %v1210, 0
        %v1258 = vsel %vm461, %v1211, 0
        %v1261 = vsel %vm461, %v1212, 0
        %v1264 = vsel %vm461, %v1213, 0
        %v1267 = vsel %vm461, %v1214, 0
        %v1270 = vsel %vm461, %v1215, 0
        %v1273 = vsel %vm461, %v1216, 0
        %v1276 = vsel %vm461, %v1217, 0
        %v1279 = vsel %vm461, %v1218, 0
        %v1282 = vsel %vm461, %v1219, 0
        %v1285 = vsel %vm461, %v1220, 0
        %v1288 = vsel %vm461, %v1221, 0
        %v1291 = vsel %vm461, %v1222, 0
        %v1294 = vsel %vm461, %v1223, 0
        %v1297 = vsel %vm461, %v1224, 0
        %v1300 = vsel %vm461, %v1225, 0
        %v1303 = vsel %vm461, %v1226, 0
        %v1306 = vsel %vm461, %v1227, 0
        %v1309 = vsel %vm461, %v1228, 0
        %v1312 = vsel %vm461, %v1229, 0
        %v1315 = vsel %vm461, %v1230, 0
        %v1318 = vsel %vm461, %v1231, 0
        %v1321 = vsel %vm461, %v1232, 0
        %v1324 = vsel %vm461, %v1233, 0
        %v1327 = vsel %vm461, %v1234, 0
        %v1330 = vsel %vm461, %v1235, 0
        %1332 = vmatprep.subr.mxu0 0.0
        %1333 = vmatpush1.msra.mxu0 %v196
        %1334 = vmatprep.subr.mxu0 0.0
        %1335 = vmatpush1.msra.mxu0 %v197
        %1336 = vmatprep.subr.mxu0 0.0
        %1337 = vmatpush1.msra.mxu0 %v198
        %1338 = vmatprep.subr.mxu0 0.0
        %1339 = vmatpush1.msra.mxu0 %v199
        %1340 = vmatprep.subr.mxu0 0.0
        %1341 = vmatpush1.msra.mxu0 %v200
        %1342 = vmatprep.subr.mxu0 0.0
        %1343 = vmatpush1.msra.mxu0 %v201
        %1344 = vmatprep.subr.mxu0 0.0
        %1345 = vmatpush1.msra.mxu0 %v202
        %1346 = vmatprep.subr.mxu0 0.0
        %1347 = vmatpush1.msra.mxu0 %v203
        %1348 = vmatprep.subr.mxu0 0.0
        %1349 = vmatpush1.msra.mxu0 0.0
        %1350 = vmatprep.subr.mxu0 0.0
        %1351 = vmatpush1.msra.mxu0 0.0
        %1352 = vmatprep.subr.mxu0 0.0
        %1353 = vmatpush1.msra.mxu0 0.0
        %1354 = vmatprep.subr.mxu0 0.0
        %1355 = vmatpush1.msra.mxu0 0.0
        %1356 = vmatprep.subr.mxu0 0.0
        %1357 = vmatpush1.msra.mxu0 0.0
        %1358 = vmatprep.subr.mxu0 0.0
        %1359 = vmatpush1.msra.mxu0 0.0
        %1360 = vmatprep.subr.mxu0 0.0
        %1361 = vmatpush1.msra.mxu0 0.0
        %1362 = vmatprep.subr.mxu0 0.0
        %1363 = vmatpush1.msra.mxu0 0.0
        %1364 = vmatprep.subr.mxu0 0.0
        %1365 = vmatpush1.msra.mxu0 0.0
        %1366 = vmatprep.subr.mxu0 0.0
        %1367 = vmatpush1.msra.mxu0 0.0
        %1368 = vmatprep.subr.mxu0 0.0
        %1369 = vmatpush1.msra.mxu0 0.0
        %1370 = vmatprep.subr.mxu0 0.0
        %1371 = vmatpush1.msra.mxu0 0.0
        %1372 = vmatprep.subr.mxu0 0.0
        %1373 = vmatpush1.msra.mxu0 0.0
        %1374 = vmatprep.subr.mxu0 0.0
        %1375 = vmatpush1.msra.mxu0 0.0
        %1376 = vmatprep.subr.mxu0 0.0
        %1377 = vmatpush1.msra.mxu0 0.0
        %1378 = vmatprep.subr.mxu0 0.0
        %1379 = vmatpush1.msra.mxu0 0.0
        %1380 = vmatprep.subr.mxu0 0.0
        %1381 = vmatpush1.msra.mxu0 0.0
        %1382 = vmatprep.subr.mxu0 0.0
        %1383 = vmatpush1.msra.mxu0 0.0
        %1384 = vmatprep.subr.mxu0 0.0
        %1385 = vmatpush1.msra.mxu0 0.0
        %1386 = vmatprep.subr.mxu0 0.0
        %1387 = vmatpush1.msra.mxu0 0.0
        %1388 = vmatprep.subr.mxu0 0.0
        %1389 = vmatpush1.msra.mxu0 0.0
        %1390 = vmatprep.subr.mxu0 0.0
        %1391 = vmatpush1.msra.mxu0 0.0
        %1392 = vmatprep.subr.mxu0 0.0
        %1393 = vmatpush1.msra.mxu0 0.0
        %1394 = vmatprep.subr.mxu0 0.0
        %1395 = vmatpush1.msra.mxu0 0.0
        %1396 = vmatprep.mubr.f32.mxu0 0.0
        %1397 = vmatmul.mubr.f32.gmra.mrb[0].mxu0 %v1237
        %v1398 = vpop.f32.mrb[0].mxu0
        %v1399 = vadd.f32 0.0, %v1398
        %v1400 = vpop.f32.mrb[0].mxu0
        %1401 = vmatprep.mubr.f32.mxu0 0.0
        %1402 = vmatmul.mubr.f32.gmra.mrb[0].mxu0 %v1240
        %v1403 = vpop.f32.mrb[0].mxu0
        %v1404 = vadd.f32 0.0, %v1403
        %v1405 = vpop.f32.mrb[0].mxu0
        %1406 = vmatprep.mubr.f32.mxu0 0.0
        %1407 = vmatmul.mubr.f32.gmra.mrb[0].mxu0 %v1243
        %v1408 = vpop.f32.mrb[0].mxu0
        %v1409 = vadd.f32 0.0, %v1408
        %v1410 = vpop.f32.mrb[0].mxu0
        %1411 = vmatprep.mubr.f32.mxu0 0.0
        %1412 = vmatmul.mubr.f32.gmra.mrb[0].mxu0 %v1246
        %v1413 = vpop.f32.mrb[0].mxu0
        %v1414 = vadd.f32 0.0, %v1413
        %v1415 = vpop.f32.mrb[0].mxu0
        %1416 = vmatprep.mubr.f32.mxu0 0.0
        %1417 = vmatmul.mubr.f32.gmra.mrb[0].mxu0 %v1249
        %v1418 = vpop.f32.mrb[0].mxu0
        %v1419 = vadd.f32 0.0, %v1418
        %v1420 = vpop.f32.mrb[0].mxu0
        %1421 = vmatprep.mubr.f32.mxu0 0.0
        %1422 = vmatmul.mubr.f32.gmra.mrb[0].mxu0 %v1252
        %v1423 = vpop.f32.mrb[0].mxu0
        %v1424 = vadd.f32 0.0, %v1423
        %v1425 = vpop.f32.mrb[0].mxu0
        %1426 = vmatprep.mubr.f32.mxu0 0.0
        %1427 = vmatmul.mubr.f32.gmra.mrb[0].mxu0 %v1255
        %v1428 = vpop.f32.mrb[0].mxu0
        %v1429 = vadd.f32 0.0, %v1428
        %v1430 = vpop.f32.mrb[0].mxu0
        %1431 = vmatprep.mubr.f32.mxu0 0.0
        %1432 = vmatmul.mubr.f32.gmra.mrb[0].mxu0 %v1258
        %v1433 = vpop.f32.mrb[0].mxu0
        %v1434 = vadd.f32 0.0, %v1433
        %v1435 = vpop.f32.mrb[0].mxu0
        %1436 = vmatprep.mubr.f32.mxu0 0.0
        %1437 = vmatmul.mubr.f32.gmra.mrb[0].mxu0 %v1261
        %v1438 = vpop.f32.mrb[0].mxu0
        %v1439 = vadd.f32 0.0, %v1438
        %v1440 = vpop.f32.mrb[0].mxu0
        %1441 = vmatprep.mubr.f32.mxu0 0.0
        %1442 = vmatmul.mubr.f32.gmra.mrb[0].mxu0 %v1264
        %v1443 = vpop.f32.mrb[0].mxu0
        %v1444 = vadd.f32 0.0, %v1443
        %v1445 = vpop.f32.mrb[0].mxu0
        %1446 = vmatprep.mubr.f32.mxu0 0.0
        %1447 = vmatmul.mubr.f32.gmra.mrb[0].mxu0 %v1267
        %v1448 = vpop.f32.mrb[0].mxu0
        %v1449 = vadd.f32 0.0, %v1448
        %v1450 = vpop.f32.mrb[0].mxu0
        %1451 = vmatprep.mubr.f32.mxu0 0.0
        %1452 = vmatmul.mubr.f32.gmra.mrb[0].mxu0 %v1270
        %v1453 = vpop.f32.mrb[0].mxu0
        %v1454 = vadd.f32 0.0, %v1453
        %v1455 = vpop.f32.mrb[0].mxu0
        %1456 = vmatprep.mubr.f32.mxu0 0.0
        %1457 = vmatmul.mubr.f32.gmra.mrb[0].mxu0 %v1273
        %v1458 = vpop.f32.mrb[0].mxu0
        %v1459 = vadd.f32 0.0, %v1458
        %v1460 = vpop.f32.mrb[0].mxu0
        %1461 = vmatprep.mubr.f32.mxu0 0.0
        %1462 = vmatmul.mubr.f32.gmra.mrb[0].mxu0 %v1276
        %v1463 = vpop.f32.mrb[0].mxu0
        %v1464 = vadd.f32 0.0, %v1463
        %v1465 = vpop.f32.mrb[0].mxu0
        %1466 = vmatprep.mubr.f32.mxu0 0.0
        %1467 = vmatmul.mubr.f32.gmra.mrb[0].mxu0 %v1279
        %v1468 = vpop.f32.mrb[0].mxu0
        %v1469 = vadd.f32 0.0, %v1468
        %v1470 = vpop.f32.mrb[0].mxu0
        %1471 = vmatprep.mubr.f32.mxu0 0.0
        %1472 = vmatmul.mubr.f32.gmra.mrb[0].mxu0 %v1282
        %v1473 = vpop.f32.mrb[0].mxu0
        %v1474 = vadd.f32 0.0, %v1473
        %v1475 = vpop.f32.mrb[0].mxu0
        %1476 = vmatprep.mubr.f32.mxu0 0.0
        %1477 = vmatmul.mubr.f32.gmra.mrb[0].mxu0 %v1285
        %v1478 = vpop.f32.mrb[0].mxu0
        %v1479 = vadd.f32 0.0, %v1478
        %v1480 = vpop.f32.mrb[0].mxu0
        %1481 = vmatprep.mubr.f32.mxu0 0.0
        %1482 = vmatmul.mubr.f32.gmra.mrb[0].mxu0 %v1288
        %v1483 = vpop.f32.mrb[0].mxu0
        %v1484 = vadd.f32 0.0, %v1483
        %v1485 = vpop.f32.mrb[0].mxu0
        %1486 = vmatprep.mubr.f32.mxu0 0.0
        %1487 = vmatmul.mubr.f32.gmra.mrb[0].mxu0 %v1291
        %v1488 = vpop.f32.mrb[0].mxu0
        %v1489 = vadd.f32 0.0, %v1488
        %v1490 = vpop.f32.mrb[0].mxu0
        %1491 = vmatprep.mubr.f32.mxu0 0.0
        %1492 = vmatmul.mubr.f32.gmra.mrb[0].mxu0 %v1294
        %v1493 = vpop.f32.mrb[0].mxu0
        %v1494 = vadd.f32 0.0, %v1493
        %v1495 = vpop.f32.mrb[0].mxu0
        %1496 = vmatprep.mubr.f32.mxu0 0.0
        %1497 = vmatmul.mubr.f32.gmra.mrb[0].mxu0 %v1297
        %v1498 = vpop.f32.mrb[0].mxu0
        %v1499 = vadd.f32 0.0, %v1498
        %v1500 = vpop.f32.mrb[0].mxu0
        %1501 = vmatprep.mubr.f32.mxu0 0.0
        %1502 = vmatmul.mubr.f32.gmra.mrb[0].mxu0 %v1300
        %v1503 = vpop.f32.mrb[0].mxu0
        %v1504 = vadd.f32 0.0, %v1503
        %v1505 = vpop.f32.mrb[0].mxu0
        %1506 = vmatprep.mubr.f32.mxu0 0.0
        %1507 = vmatmul.mubr.f32.gmra.mrb[0].mxu0 %v1303
        %v1508 = vpop.f32.mrb[0].mxu0
        %v1509 = vadd.f32 0.0, %v1508
        %v1510 = vpop.f32.mrb[0].mxu0
        %1511 = vmatprep.mubr.f32.mxu0 0.0
        %1512 = vmatmul.mubr.f32.gmra.mrb[0].mxu0 %v1306
        %v1513 = vpop.f32.mrb[0].mxu0
        %v1514 = vadd.f32 0.0, %v1513
        %v1515 = vpop.f32.mrb[0].mxu0
        %1516 = vmatprep.mubr.f32.mxu0 0.0
        %1517 = vmatmul.mubr.f32.gmra.mrb[0].mxu0 %v1309
        %v1518 = vpop.f32.mrb[0].mxu0
        %v1519 = vadd.f32 0.0, %v1518
        %v1520 = vpop.f32.mrb[0].mxu0
        %1521 = vmatprep.mubr.f32.mxu0 0.0
        %1522 = vmatmul.mubr.f32.gmra.mrb[0].mxu0 %v1312
        %v1523 = vpop.f32.mrb[0].mxu0
        %v1524 = vadd.f32 0.0, %v1523
        %v1525 = vpop.f32.mrb[0].mxu0
        %1526 = vmatprep.mubr.f32.mxu0 0.0
        %1527 = vmatmul.mubr.f32.gmra.mrb[0].mxu0 %v1315
        %v1528 = vpop.f32.mrb[0].mxu0
        %v1529 = vadd.f32 0.0, %v1528
        %v1530 = vpop.f32.mrb[0].mxu0
        %1531 = vmatprep.mubr.f32.mxu0 0.0
        %1532 = vmatmul.mubr.f32.gmra.mrb[0].mxu0 %v1318
        %v1533 = vpop.f32.mrb[0].mxu0
        %v1534 = vadd.f32 0.0, %v1533
        %v1535 = vpop.f32.mrb[0].mxu0
        %1536 = vmatprep.mubr.f32.mxu0 0.0
        %1537 = vmatmul.mubr.f32.gmra.mrb[0].mxu0 %v1321
        %v1538 = vpop.f32.mrb[0].mxu0
        %v1539 = vadd.f32 0.0, %v1538
        %v1540 = vpop.f32.mrb[0].mxu0
        %1541 = vmatprep.mubr.f32.mxu0 0.0
        %1542 = vmatmul.mubr.f32.gmra.mrb[0].mxu0 %v1324
        %v1543 = vpop.f32.mrb[0].mxu0
        %v1544 = vadd.f32 0.0, %v1543
        %v1545 = vpop.f32.mrb[0].mxu0
        %1546 = vmatprep.mubr.f32.mxu0 0.0
        %1547 = vmatmul.mubr.f32.gmra.mrb[0].mxu0 %v1327
        %v1548 = vpop.f32.mrb[0].mxu0
        %v1549 = vadd.f32 0.0, %v1548
        %v1550 = vpop.f32.mrb[0].mxu0
        %1551 = vmatprep.mubr.f32.mxu0 0.0
        %1552 = vmatmul.mubr.f32.gmra.mrb[0].mxu0 %v1330
        %v1553 = vpop.f32.mrb[0].mxu0
        %v1554 = vadd.f32 0.0, %v1553
        %v1555 = vpop.f32.mrb[0].mxu0
        %1556 = vdwg.mxu0
        %v1557 = vld [vmem:[#allocation2] sm:$0xff]
        %v1558 = vld [vmem:[#allocation2 + $0x8] sm:$0xff]
        %v1559 = vld [vmem:[#allocation2 + $0x10] sm:$0xff]
        %v1560 = vld [vmem:[#allocation2 + $0x18] sm:$0xff]
        %v1561 = vld [vmem:[#allocation2 + $0x20] sm:$0xff]
        %v1562 = vld [vmem:[#allocation2 + $0x28] sm:$0xff]
        %v1563 = vld [vmem:[#allocation2 + $0x30] sm:$0xff]
        %v1564 = vld [vmem:[#allocation2 + $0x38] sm:$0xff]
        %v1565 = vld [vmem:[#allocation2 + $0x40] sm:$0xff]
        %v1566 = vld [vmem:[#allocation2 + $0x48] sm:$0xff]
        %v1567 = vld [vmem:[#allocation2 + $0x50] sm:$0xff]
        %v1568 = vld [vmem:[#allocation2 + $0x58] sm:$0xff]
        %v1569 = vld [vmem:[#allocation2 + $0x60] sm:$0xff]
        %v1570 = vld [vmem:[#allocation2 + $0x68] sm:$0xff]
        %v1571 = vld [vmem:[#allocation2 + $0x70] sm:$0xff]
        %v1572 = vld [vmem:[#allocation2 + $0x78] sm:$0xff]
        %v1573 = vld [vmem:[#allocation2 + $0x80] sm:$0xff]
        %v1574 = vld [vmem:[#allocation2 + $0x88] sm:$0xff]
        %v1575 = vld [vmem:[#allocation2 + $0x90] sm:$0xff]
        %v1576 = vld [vmem:[#allocation2 + $0x98] sm:$0xff]
        %v1577 = vld [vmem:[#allocation2 + $0xa0] sm:$0xff]
        %v1578 = vld [vmem:[#allocation2 + $0xa8] sm:$0xff]
        %v1579 = vld [vmem:[#allocation2 + $0xb0] sm:$0xff]
        %v1580 = vld [vmem:[#allocation2 + $0xb8] sm:$0xff]
        %v1581 = vld [vmem:[#allocation2 + $0xc0] sm:$0xff]
        %v1582 = vld [vmem:[#allocation2 + $0xc8] sm:$0xff]
        %v1583 = vld [vmem:[#allocation2 + $0xd0] sm:$0xff]
        %v1584 = vld [vmem:[#allocation2 + $0xd8] sm:$0xff]
        %v1585 = vld [vmem:[#allocation2 + $0xe0] sm:$0xff]
        %v1586 = vld [vmem:[#allocation2 + $0xe8] sm:$0xff]
        %v1587 = vld [vmem:[#allocation2 + $0xf0] sm:$0xff]
        %v1588 = vld [vmem:[#allocation2 + $0xf8] sm:$0xff]
        %s1589 = scalar_lea.vmem %s1, 16
        %v1590 = vld [vmem:[%s1589] sm:$0xff]
        %v1591 = vld [vmem:[%s1589 + $0x8] sm:$0xff]
        %v1593 = vsel %vm817, %v1399, 0
        %v1596 = vsel %vm817, %v1404, 0
        %v1599 = vsel %vm817, %v1409, 0
        %v1602 = vsel %vm817, %v1414, 0
        %v1605 = vsel %vm817, %v1419, 0
        %v1608 = vsel %vm817, %v1424, 0
        %v1611 = vsel %vm817, %v1429, 0
        %v1614 = vsel %vm817, %v1434, 0
        %v1617 = vsel %vm817, %v1439, 0
        %v1620 = vsel %vm817, %v1444, 0
        %v1623 = vsel %vm817, %v1449, 0
        %v1626 = vsel %vm817, %v1454, 0
        %v1629 = vsel %vm817, %v1459, 0
        %v1632 = vsel %vm817, %v1464, 0
        %v1635 = vsel %vm817, %v1469, 0
        %v1638 = vsel %vm817, %v1474, 0
        %v1641 = vsel %vm817, %v1479, 0
        %v1644 = vsel %vm817, %v1484, 0
        %v1647 = vsel %vm817, %v1489, 0
        %v1650 = vsel %vm817, %v1494, 0
        %v1653 = vsel %vm817, %v1499, 0
        %v1656 = vsel %vm817, %v1504, 0
        %v1659 = vsel %vm817, %v1509, 0
        %v1662 = vsel %vm817, %v1514, 0
        %v1665 = vsel %vm817, %v1519, 0
        %v1668 = vsel %vm817, %v1524, 0
        %v1671 = vsel %vm817, %v1529, 0
        %v1674 = vsel %vm817, %v1534, 0
        %v1677 = vsel %vm817, %v1539, 0
        %v1680 = vsel %vm817, %v1544, 0
        %v1683 = vsel %vm817, %v1549, 0
        %v1686 = vsel %vm817, %v1554, 0
        %1688 = vmatprep.subr.mxu0 0.0
        %1689 = vmatpush1.msra.mxu0 %v1590
        %1690 = vmatprep.subr.mxu0 0.0
        %1691 = vmatpush1.msra.mxu0 %v1591
        %1692 = vmatprep.subr.mxu0 0.0
        %1693 = vmatpush1.msra.mxu0 0.0
        %1694 = vmatprep.subr.mxu0 0.0
        %1695 = vmatpush1.msra.mxu0 0.0
        %1696 = vmatprep.subr.mxu0 0.0
        %1697 = vmatpush1.msra.mxu0 0.0
        %1698 = vmatprep.subr.mxu0 0.0
        %1699 = vmatpush1.msra.mxu0 0.0
        %1700 = vmatprep.subr.mxu0 0.0
        %1701 = vmatpush1.msra.mxu0 0.0
        %1702 = vmatprep.subr.mxu0 0.0
        %1703 = vmatpush1.msra.mxu0 0.0
        %1704 = vmatprep.subr.mxu0 0.0
        %1705 = vmatpush1.msra.mxu0 0.0
        %1706 = vmatprep.subr.mxu0 0.0
        %1707 = vmatpush1.msra.mxu0 0.0
        %1708 = vmatprep.subr.mxu0 0.0
        %1709 = vmatpush1.msra.mxu0 0.0
        %1710 = vmatprep.subr.mxu0 0.0
        %1711 = vmatpush1.msra.mxu0 0.0
        %1712 = vmatprep.subr.mxu0 0.0
        %1713 = vmatpush1.msra.mxu0 0.0
        %1714 = vmatprep.subr.mxu0 0.0
        %1715 = vmatpush1.msra.mxu0 0.0
        %1716 = vmatprep.subr.mxu0 0.0
        %1717 = vmatpush1.msra.mxu0 0.0
        %1718 = vmatprep.subr.mxu0 0.0
        %1719 = vmatpush1.msra.mxu0 0.0
        %1720 = vmatprep.subr.mxu0 0.0
        %1721 = vmatpush1.msra.mxu0 0.0
        %1722 = vmatprep.subr.mxu0 0.0
        %1723 = vmatpush1.msra.mxu0 0.0
        %1724 = vmatprep.subr.mxu0 0.0
        %1725 = vmatpush1.msra.mxu0 0.0
        %1726 = vmatprep.subr.mxu0 0.0
        %1727 = vmatpush1.msra.mxu0 0.0
        %1728 = vmatprep.subr.mxu0 0.0
        %1729 = vmatpush1.msra.mxu0 0.0
        %1730 = vmatprep.subr.mxu0 0.0
        %1731 = vmatpush1.msra.mxu0 0.0
        %1732 = vmatprep.subr.mxu0 0.0
        %1733 = vmatpush1.msra.mxu0 0.0
        %1734 = vmatprep.subr.mxu0 0.0
        %1735 = vmatpush1.msra.mxu0 0.0
        %1736 = vmatprep.subr.mxu0 0.0
        %1737 = vmatpush1.msra.mxu0 0.0
        %1738 = vmatprep.subr.mxu0 0.0
        %1739 = vmatpush1.msra.mxu0 0.0
        %1740 = vmatprep.subr.mxu0 0.0
        %1741 = vmatpush1.msra.mxu0 0.0
        %1742 = vmatprep.subr.mxu0 0.0
        %1743 = vmatpush1.msra.mxu0 0.0
        %1744 = vmatprep.subr.mxu0 0.0
        %1745 = vmatpush1.msra.mxu0 0.0
        %1746 = vmatprep.subr.mxu0 0.0
        %1747 = vmatpush1.msra.mxu0 0.0
        %1748 = vmatprep.subr.mxu0 0.0
        %1749 = vmatpush1.msra.mxu0 0.0
        %1750 = vmatprep.subr.mxu0 0.0
        %1751 = vmatpush1.msra.mxu0 0.0
        %1752 = vmatprep.mubr.f32.mxu0 0.0
        %1753 = vmatmul.mubr.f32.gmra.mrb[0].mxu0 %v1593
        %v1754 = vpop.f32.mrb[0].mxu0
        %v1755 = vadd.f32 0.0, %v1754
        %v1756 = vpop.f32.mrb[0].mxu0
        %1757 = vmatprep.mubr.f32.mxu0 0.0
        %1758 = vmatmul.mubr.f32.gmra.mrb[0].mxu0 %v1596
        %v1759 = vpop.f32.mrb[0].mxu0
        %v1760 = vadd.f32 0.0, %v1759
        %v1761 = vpop.f32.mrb[0].mxu0
        %1762 = vmatprep.mubr.f32.mxu0 0.0
        %1763 = vmatmul.mubr.f32.gmra.mrb[0].mxu0 %v1599
        %v1764 = vpop.f32.mrb[0].mxu0
        %v1765 = vadd.f32 0.0, %v1764
        %v1766 = vpop.f32.mrb[0].mxu0
        %1767 = vmatprep.mubr.f32.mxu0 0.0
        %1768 = vmatmul.mubr.f32.gmra.mrb[0].mxu0 %v1602
        %v1769 = vpop.f32.mrb[0].mxu0
        %v1770 = vadd.f32 0.0, %v1769
        %v1771 = vpop.f32.mrb[0].mxu0
        %1772 = vmatprep.mubr.f32.mxu0 0.0
        %1773 = vmatmul.mubr.f32.gmra.mrb[0].mxu0 %v1605
        %v1774 = vpop.f32.mrb[0].mxu0
        %v1775 = vadd.f32 0.0, %v1774
        %v1776 = vpop.f32.mrb[0].mxu0
        %1777 = vmatprep.mubr.f32.mxu0 0.0
        %1778 = vmatmul.mubr.f32.gmra.mrb[0].mxu0 %v1608
        %v1779 = vpop.f32.mrb[0].mxu0
        %v1780 = vadd.f32 0.0, %v1779
        %v1781 = vpop.f32.mrb[0].mxu0
        %1782 = vmatprep.mubr.f32.mxu0 0.0
        %1783 = vmatmul.mubr.f32.gmra.mrb[0].mxu0 %v1611
        %v1784 = vpop.f32.mrb[0].mxu0
        %v1785 = vadd.f32 0.0, %v1784
        %v1786 = vpop.f32.mrb[0].mxu0
        %1787 = vmatprep.mubr.f32.mxu0 0.0
        %1788 = vmatmul.mubr.f32.gmra.mrb[0].mxu0 %v1614
        %v1789 = vpop.f32.mrb[0].mxu0
        %v1790 = vadd.f32 0.0, %v1789
        %v1791 = vpop.f32.mrb[0].mxu0
        %1792 = vmatprep.mubr.f32.mxu0 0.0
        %1793 = vmatmul.mubr.f32.gmra.mrb[0].mxu0 %v1617
        %v1794 = vpop.f32.mrb[0].mxu0
        %v1795 = vadd.f32 0.0, %v1794
        %v1796 = vpop.f32.mrb[0].mxu0
        %1797 = vmatprep.mubr.f32.mxu0 0.0
        %1798 = vmatmul.mubr.f32.gmra.mrb[0].mxu0 %v1620
        %v1799 = vpop.f32.mrb[0].mxu0
        %v1800 = vadd.f32 0.0, %v1799
        %v1801 = vpop.f32.mrb[0].mxu0
        %1802 = vmatprep.mubr.f32.mxu0 0.0
        %1803 = vmatmul.mubr.f32.gmra.mrb[0].mxu0 %v1623
        %v1804 = vpop.f32.mrb[0].mxu0
        %v1805 = vadd.f32 0.0, %v1804
        %v1806 = vpop.f32.mrb[0].mxu0
        %1807 = vmatprep.mubr.f32.mxu0 0.0
        %1808 = vmatmul.mubr.f32.gmra.mrb[0].mxu0 %v1626
        %v1809 = vpop.f32.mrb[0].mxu0
        %v1810 = vadd.f32 0.0, %v1809
        %v1811 = vpop.f32.mrb[0].mxu0
        %1812 = vmatprep.mubr.f32.mxu0 0.0
        %1813 = vmatmul.mubr.f32.gmra.mrb[0].mxu0 %v1629
        %v1814 = vpop.f32.mrb[0].mxu0
        %v1815 = vadd.f32 0.0, %v1814
        %v1816 = vpop.f32.mrb[0].mxu0
        %1817 = vmatprep.mubr.f32.mxu0 0.0
        %1818 = vmatmul.mubr.f32.gmra.mrb[0].mxu0 %v1632
        %v1819 = vpop.f32.mrb[0].mxu0
        %v1820 = vadd.f32 0.0, %v1819
        %v1821 = vpop.f32.mrb[0].mxu0
        %1822 = vmatprep.mubr.f32.mxu0 0.0
        %1823 = vmatmul.mubr.f32.gmra.mrb[0].mxu0 %v1635
        %v1824 = vpop.f32.mrb[0].mxu0
        %v1825 = vadd.f32 0.0, %v1824
        %v1826 = vpop.f32.mrb[0].mxu0
        %1827 = vmatprep.mubr.f32.mxu0 0.0
        %1828 = vmatmul.mubr.f32.gmra.mrb[0].mxu0 %v1638
        %v1829 = vpop.f32.mrb[0].mxu0
        %v1830 = vadd.f32 0.0, %v1829
        %v1831 = vpop.f32.mrb[0].mxu0
        %1832 = vmatprep.mubr.f32.mxu0 0.0
        %1833 = vmatmul.mubr.f32.gmra.mrb[0].mxu0 %v1641
        %v1834 = vpop.f32.mrb[0].mxu0
        %v1835 = vadd.f32 0.0, %v1834
        %v1836 = vpop.f32.mrb[0].mxu0
        %1837 = vmatprep.mubr.f32.mxu0 0.0
        %1838 = vmatmul.mubr.f32.gmra.mrb[0].mxu0 %v1644
        %v1839 = vpop.f32.mrb[0].mxu0
        %v1840 = vadd.f32 0.0, %v1839
        %v1841 = vpop.f32.mrb[0].mxu0
        %1842 = vmatprep.mubr.f32.mxu0 0.0
        %1843 = vmatmul.mubr.f32.gmra.mrb[0].mxu0 %v1647
        %v1844 = vpop.f32.mrb[0].mxu0
        %v1845 = vadd.f32 0.0, %v1844
        %v1846 = vpop.f32.mrb[0].mxu0
        %1847 = vmatprep.mubr.f32.mxu0 0.0
        %1848 = vmatmul.mubr.f32.gmra.mrb[0].mxu0 %v1650
        %v1849 = vpop.f32.mrb[0].mxu0
        %v1850 = vadd.f32 0.0, %v1849
        %v1851 = vpop.f32.mrb[0].mxu0
        %1852 = vmatprep.mubr.f32.mxu0 0.0
        %1853 = vmatmul.mubr.f32.gmra.mrb[0].mxu0 %v1653
        %v1854 = vpop.f32.mrb[0].mxu0
        %v1855 = vadd.f32 0.0, %v1854
        %v1856 = vpop.f32.mrb[0].mxu0
        %1857 = vmatprep.mubr.f32.mxu0 0.0
        %1858 = vmatmul.mubr.f32.gmra.mrb[0].mxu0 %v1656
        %v1859 = vpop.f32.mrb[0].mxu0
        %v1860 = vadd.f32 0.0, %v1859
        %v1861 = vpop.f32.mrb[0].mxu0
        %1862 = vmatprep.mubr.f32.mxu0 0.0
        %1863 = vmatmul.mubr.f32.gmra.mrb[0].mxu0 %v1659
        %v1864 = vpop.f32.mrb[0].mxu0
        %v1865 = vadd.f32 0.0, %v1864
        %v1866 = vpop.f32.mrb[0].mxu0
        %1867 = vmatprep.mubr.f32.mxu0 0.0
        %1868 = vmatmul.mubr.f32.gmra.mrb[0].mxu0 %v1662
        %v1869 = vpop.f32.mrb[0].mxu0
        %v1870 = vadd.f32 0.0, %v1869
        %v1871 = vpop.f32.mrb[0].mxu0
        %1872 = vmatprep.mubr.f32.mxu0 0.0
        %1873 = vmatmul.mubr.f32.gmra.mrb[0].mxu0 %v1665
        %v1874 = vpop.f32.mrb[0].mxu0
        %v1875 = vadd.f32 0.0, %v1874
        %v1876 = vpop.f32.mrb[0].mxu0
        %1877 = vmatprep.mubr.f32.mxu0 0.0
        %1878 = vmatmul.mubr.f32.gmra.mrb[0].mxu0 %v1668
        %v1879 = vpop.f32.mrb[0].mxu0
        %v1880 = vadd.f32 0.0, %v1879
        %v1881 = vpop.f32.mrb[0].mxu0
        %1882 = vmatprep.mubr.f32.mxu0 0.0
        %1883 = vmatmul.mubr.f32.gmra.mrb[0].mxu0 %v1671
        %v1884 = vpop.f32.mrb[0].mxu0
        %v1885 = vadd.f32 0.0, %v1884
        %v1886 = vpop.f32.mrb[0].mxu0
        %1887 = vmatprep.mubr.f32.mxu0 0.0
        %1888 = vmatmul.mubr.f32.gmra.mrb[0].mxu0 %v1674
        %v1889 = vpop.f32.mrb[0].mxu0
        %v1890 = vadd.f32 0.0, %v1889
        %v1891 = vpop.f32.mrb[0].mxu0
        %1892 = vmatprep.mubr.f32.mxu0 0.0
        %1893 = vmatmul.mubr.f32.gmra.mrb[0].mxu0 %v1677
        %v1894 = vpop.f32.mrb[0].mxu0
        %v1895 = vadd.f32 0.0, %v1894
        %v1896 = vpop.f32.mrb[0].mxu0
        %1897 = vmatprep.mubr.f32.mxu0 0.0
        %1898 = vmatmul.mubr.f32.gmra.mrb[0].mxu0 %v1680
        %v1899 = vpop.f32.mrb[0].mxu0
        %v1900 = vadd.f32 0.0, %v1899
        %v1901 = vpop.f32.mrb[0].mxu0
        %1902 = vmatprep.mubr.f32.mxu0 0.0
        %1903 = vmatmul.mubr.f32.gmra.mrb[0].mxu0 %v1683
        %v1904 = vpop.f32.mrb[0].mxu0
        %v1905 = vadd.f32 0.0, %v1904
        %v1906 = vpop.f32.mrb[0].mxu0
        %1907 = vmatprep.mubr.f32.mxu0 0.0
        %1908 = vmatmul.mubr.f32.gmra.mrb[0].mxu0 %v1686
        %v1909 = vpop.f32.mrb[0].mxu0
        %v1910 = vadd.f32 0.0, %v1909
        %v1911 = vpop.f32.mrb[0].mxu0
        %1912 = vdwg.mxu0
        %v1913 = vadd.f32 %v1557, %v1755
        %v1914 = vadd.f32 %v1558, %v1760
        %v1915 = vadd.f32 %v1559, %v1765
        %v1916 = vadd.f32 %v1560, %v1770
        %v1917 = vadd.f32 %v1561, %v1775
        %v1918 = vadd.f32 %v1562, %v1780
        %v1919 = vadd.f32 %v1563, %v1785
        %v1920 = vadd.f32 %v1564, %v1790
        %v1921 = vadd.f32 %v1565, %v1795
        %v1922 = vadd.f32 %v1566, %v1800
        %v1923 = vadd.f32 %v1567, %v1805
        %v1924 = vadd.f32 %v1568, %v1810
        %v1925 = vadd.f32 %v1569, %v1815
        %v1926 = vadd.f32 %v1570, %v1820
        %v1927 = vadd.f32 %v1571, %v1825
        %v1928 = vadd.f32 %v1572, %v1830
        %v1929 = vadd.f32 %v1573, %v1835
        %v1930 = vadd.f32 %v1574, %v1840
        %v1931 = vadd.f32 %v1575, %v1845
        %v1932 = vadd.f32 %v1576, %v1850
        %v1933 = vadd.f32 %v1577, %v1855
        %v1934 = vadd.f32 %v1578, %v1860
        %v1935 = vadd.f32 %v1579, %v1865
        %v1936 = vadd.f32 %v1580, %v1870
        %v1937 = vadd.f32 %v1581, %v1875
        %v1938 = vadd.f32 %v1582, %v1880
        %v1939 = vadd.f32 %v1583, %v1885
        %v1940 = vadd.f32 %v1584, %v1890
        %v1941 = vadd.f32 %v1585, %v1895
        %v1942 = vadd.f32 %v1586, %v1900
        %v1943 = vadd.f32 %v1587, %v1905
        %v1944 = vadd.f32 %v1588, %v1910
        %1945 = vst.msk [vmem:[#allocation2] sm:$0xff] %vm396, %v1913
        %1946 = vst.msk [vmem:[#allocation2 + $0x8] sm:$0xff] %vm396, %v1914
        %1947 = vst.msk [vmem:[#allocation2 + $0x10] sm:$0xff] %vm396, %v1915
        %1948 = vst.msk [vmem:[#allocation2 + $0x18] sm:$0xff] %vm396, %v1916
        %1949 = vst.msk [vmem:[#allocation2 + $0x20] sm:$0xff] %vm396, %v1917
        %1950 = vst.msk [vmem:[#allocation2 + $0x28] sm:$0xff] %vm396, %v1918
        %1951 = vst.msk [vmem:[#allocation2 + $0x30] sm:$0xff] %vm396, %v1919
        %1952 = vst.msk [vmem:[#allocation2 + $0x38] sm:$0xff] %vm396, %v1920
        %1953 = vst.msk [vmem:[#allocation2 + $0x40] sm:$0xff] %vm396, %v1921
        %1954 = vst.msk [vmem:[#allocation2 + $0x48] sm:$0xff] %vm396, %v1922
        %1955 = vst.msk [vmem:[#allocation2 + $0x50] sm:$0xff] %vm396, %v1923
        %1956 = vst.msk [vmem:[#allocation2 + $0x58] sm:$0xff] %vm396, %v1924
        %1957 = vst.msk [vmem:[#allocation2 + $0x60] sm:$0xff] %vm396, %v1925
        %1958 = vst.msk [vmem:[#allocation2 + $0x68] sm:$0xff] %vm396, %v1926
        %1959 = vst.msk [vmem:[#allocation2 + $0x70] sm:$0xff] %vm396, %v1927
        %1960 = vst.msk [vmem:[#allocation2 + $0x78] sm:$0xff] %vm396, %v1928
        %1961 = vst.msk [vmem:[#allocation2 + $0x80] sm:$0xff] %vm396, %v1929
        %1962 = vst.msk [vmem:[#allocation2 + $0x88] sm:$0xff] %vm396, %v1930
        %1963 = vst.msk [vmem:[#allocation2 + $0x90] sm:$0xff] %vm396, %v1931
        %1964 = vst.msk [vmem:[#allocation2 + $0x98] sm:$0xff] %vm396, %v1932
        %1965 = vst.msk [vmem:[#allocation2 + $0xa0] sm:$0xff] %vm396, %v1933
        %1966 = vst.msk [vmem:[#allocation2 + $0xa8] sm:$0xff] %vm396, %v1934
        %1967 = vst.msk [vmem:[#allocation2 + $0xb0] sm:$0xff] %vm396, %v1935
        %1968 = vst.msk [vmem:[#allocation2 + $0xb8] sm:$0xff] %vm396, %v1936
        %1969 = vst.msk [vmem:[#allocation2 + $0xc0] sm:$0xff] %vm396, %v1937
        %1970 = vst.msk [vmem:[#allocation2 + $0xc8] sm:$0xff] %vm396, %v1938
        %1971 = vst.msk [vmem:[#allocation2 + $0xd0] sm:$0xff] %vm396, %v1939
        %1972 = vst.msk [vmem:[#allocation2 + $0xd8] sm:$0xff] %vm396, %v1940
        %1973 = vst.msk [vmem:[#allocation2 + $0xe0] sm:$0xff] %vm396, %v1941
        %1974 = vst.msk [vmem:[#allocation2 + $0xe8] sm:$0xff] %vm396, %v1942
        %1975 = vst.msk [vmem:[#allocation2 + $0xf0] sm:$0xff] %vm396, %v1943
        %1976 = vst.msk [vmem:[#allocation2 + $0xf8] sm:$0xff] %vm396, %v1944
        %s1977 = scalar_lea.vmem %s2, 512
        %v1978 = vld [vmem:[%s1977] sm:$0xff]
        %v1979 = vld [vmem:[%s1977 + $0x8] sm:$0xff]
        %v1980 = vld [vmem:[%s1977 + $0x10] sm:$0xff]
        %v1981 = vld [vmem:[%s1977 + $0x18] sm:$0xff]
        %v1982 = vld [vmem:[%s1977 + $0x20] sm:$0xff]
        %v1983 = vld [vmem:[%s1977 + $0x28] sm:$0xff]
        %v1984 = vld [vmem:[%s1977 + $0x30] sm:$0xff]
        %v1985 = vld [vmem:[%s1977 + $0x38] sm:$0xff]
        %v1986 = vld [vmem:[%s1977 + $0x40] sm:$0xff]
        %v1987 = vld [vmem:[%s1977 + $0x48] sm:$0xff]
        %v1988 = vld [vmem:[%s1977 + $0x50] sm:$0xff]
        %v1989 = vld [vmem:[%s1977 + $0x58] sm:$0xff]
        %v1990 = vld [vmem:[%s1977 + $0x60] sm:$0xff]
        %v1991 = vld [vmem:[%s1977 + $0x68] sm:$0xff]
        %v1992 = vld [vmem:[%s1977 + $0x70] sm:$0xff]
        %v1993 = vld [vmem:[%s1977 + $0x78] sm:$0xff]
        %v1994 = vld [vmem:[%s1977 + $0x80] sm:$0xff]
        %v1995 = vld [vmem:[%s1977 + $0x88] sm:$0xff]
        %v1996 = vld [vmem:[%s1977 + $0x90] sm:$0xff]
        %v1997 = vld [vmem:[%s1977 + $0x98] sm:$0xff]
        %v1998 = vld [vmem:[%s1977 + $0xa0] sm:$0xff]
        %v1999 = vld [vmem:[%s1977 + $0xa8] sm:$0xff]
        %v2000 = vld [vmem:[%s1977 + $0xb0] sm:$0xff]
        %v2001 = vld [vmem:[%s1977 + $0xb8] sm:$0xff]
        %v2002 = vld [vmem:[%s1977 + $0xc0] sm:$0xff]
        %v2003 = vld [vmem:[%s1977 + $0xc8] sm:$0xff]
        %v2004 = vld [vmem:[%s1977 + $0xd0] sm:$0xff]
        %v2005 = vld [vmem:[%s1977 + $0xd8] sm:$0xff]
        %v2006 = vld [vmem:[%s1977 + $0xe0] sm:$0xff]
        %v2007 = vld [vmem:[%s1977 + $0xe8] sm:$0xff]
        %v2008 = vld [vmem:[%s1977 + $0xf0] sm:$0xff]
        %v2009 = vld [vmem:[%s1977 + $0xf8] sm:$0xff]
        %v2011 = vsel %vm461, %v1978, 0
        %v2014 = vsel %vm461, %v1979, 0
        %v2017 = vsel %vm461, %v1980, 0
        %v2020 = vsel %vm461, %v1981, 0
        %v2023 = vsel %vm461, %v1982, 0
        %v2026 = vsel %vm461, %v1983, 0
        %v2029 = vsel %vm461, %v1984, 0
        %v2032 = vsel %vm461, %v1985, 0
        %v2035 = vsel %vm461, %v1986, 0
        %v2038 = vsel %vm461, %v1987, 0
        %v2041 = vsel %vm461, %v1988, 0
        %v2044 = vsel %vm461, %v1989, 0
        %v2047 = vsel %vm461, %v1990, 0
        %v2050 = vsel %vm461, %v1991, 0
        %v2053 = vsel %vm461, %v1992, 0
        %v2056 = vsel %vm461, %v1993, 0
        %v2059 = vsel %vm461, %v1994, 0
        %v2062 = vsel %vm461, %v1995, 0
        %v2065 = vsel %vm461, %v1996, 0
        %v2068 = vsel %vm461, %v1997, 0
        %v2071 = vsel %vm461, %v1998, 0
        %v2074 = vsel %vm461, %v1999, 0
        %v2077 = vsel %vm461, %v2000, 0
        %v2080 = vsel %vm461, %v2001, 0
        %v2083 = vsel %vm461, %v2002, 0
        %v2086 = vsel %vm461, %v2003, 0
        %v2089 = vsel %vm461, %v2004, 0
        %v2092 = vsel %vm461, %v2005, 0
        %v2095 = vsel %vm461, %v2006, 0
        %v2098 = vsel %vm461, %v2007, 0
        %v2101 = vsel %vm461, %v2008, 0
        %v2104 = vsel %vm461, %v2009, 0
        %2106 = vmatprep.subr.mxu0 0.0
        %2107 = vmatpush1.msra.mxu0 %v196
        %2108 = vmatprep.subr.mxu0 0.0
        %2109 = vmatpush1.msra.mxu0 %v197
        %2110 = vmatprep.subr.mxu0 0.0
        %2111 = vmatpush1.msra.mxu0 %v198
        %2112 = vmatprep.subr.mxu0 0.0
        %2113 = vmatpush1.msra.mxu0 %v199
        %2114 = vmatprep.subr.mxu0 0.0
        %2115 = vmatpush1.msra.mxu0 %v200
        %2116 = vmatprep.subr.mxu0 0.0
        %2117 = vmatpush1.msra.mxu0 %v201
        %2118 = vmatprep.subr.mxu0 0.0
        %2119 = vmatpush1.msra.mxu0 %v202
        %2120 = vmatprep.subr.mxu0 0.0
        %2121 = vmatpush1.msra.mxu0 %v203
        %2122 = vmatprep.subr.mxu0 0.0
        %2123 = vmatpush1.msra.mxu0 0.0
        %2124 = vmatprep.subr.mxu0 0.0
        %2125 = vmatpush1.msra.mxu0 0.0
        %2126 = vmatprep.subr.mxu0 0.0
        %2127 = vmatpush1.msra.mxu0 0.0
        %2128 = vmatprep.subr.mxu0 0.0
        %2129 = vmatpush1.msra.mxu0 0.0
        %2130 = vmatprep.subr.mxu0 0.0
        %2131 = vmatpush1.msra.mxu0 0.0
        %2132 = vmatprep.subr.mxu0 0.0
        %2133 = vmatpush1.msra.mxu0 0.0
        %2134 = vmatprep.subr.mxu0 0.0
        %2135 = vmatpush1.msra.mxu0 0.0
        %2136 = vmatprep.subr.mxu0 0.0
        %2137 = vmatpush1.msra.mxu0 0.0
        %2138 = vmatprep.subr.mxu0 0.0
        %2139 = vmatpush1.msra.mxu0 0.0
        %2140 = vmatprep.subr.mxu0 0.0
        %2141 = vmatpush1.msra.mxu0 0.0
        %2142 = vmatprep.subr.mxu0 0.0
        %2143 = vmatpush1.msra.mxu0 0.0
        %2144 = vmatprep.subr.mxu0 0.0
        %2145 = vmatpush1.msra.mxu0 0.0
        %2146 = vmatprep.subr.mxu0 0.0
        %2147 = vmatpush1.msra.mxu0 0.0
        %2148 = vmatprep.subr.mxu0 0.0
        %2149 = vmatpush1.msra.mxu0 0.0
        %2150 = vmatprep.subr.mxu0 0.0
        %2151 = vmatpush1.msra.mxu0 0.0
        %2152 = vmatprep.subr.mxu0 0.0
        %2153 = vmatpush1.msra.mxu0 0.0
        %2154 = vmatprep.subr.mxu0 0.0
        %2155 = vmatpush1.msra.mxu0 0.0
        %2156 = vmatprep.subr.mxu0 0.0
        %2157 = vmatpush1.msra.mxu0 0.0
        %2158 = vmatprep.subr.mxu0 0.0
        %2159 = vmatpush1.msra.mxu0 0.0
        %2160 = vmatprep.subr.mxu0 0.0
        %2161 = vmatpush1.msra.mxu0 0.0
        %2162 = vmatprep.subr.mxu0 0.0
        %2163 = vmatpush1.msra.mxu0 0.0
        %2164 = vmatprep.subr.mxu0 0.0
        %2165 = vmatpush1.msra.mxu0 0.0
        %2166 = vmatprep.subr.mxu0 0.0
        %2167 = vmatpush1.msra.mxu0 0.0
        %2168 = vmatprep.subr.mxu0 0.0
        %2169 = vmatpush1.msra.mxu0 0.0
        %2170 = vmatprep.mubr.f32.mxu0 0.0
        %2171 = vmatmul.mubr.f32.gmra.mrb[0].mxu0 %v2011
        %v2172 = vpop.f32.mrb[0].mxu0
        %v2173 = vadd.f32 0.0, %v2172
        %v2174 = vpop.f32.mrb[0].mxu0
        %2175 = vmatprep.mubr.f32.mxu0 0.0
        %2176 = vmatmul.mubr.f32.gmra.mrb[0].mxu0 %v2014
        %v2177 = vpop.f32.mrb[0].mxu0
        %v2178 = vadd.f32 0.0, %v2177
        %v2179 = vpop.f32.mrb[0].mxu0
        %2180 = vmatprep.mubr.f32.mxu0 0.0
        %2181 = vmatmul.mubr.f32.gmra.mrb[0].mxu0 %v2017
        %v2182 = vpop.f32.mrb[0].mxu0
        %v2183 = vadd.f32 0.0, %v2182
        %v2184 = vpop.f32.mrb[0].mxu0
        %2185 = vmatprep.mubr.f32.mxu0 0.0
        %2186 = vmatmul.mubr.f32.gmra.mrb[0].mxu0 %v2020
        %v2187 = vpop.f32.mrb[0].mxu0
        %v2188 = vadd.f32 0.0, %v2187
        %v2189 = vpop.f32.mrb[0].mxu0
        %2190 = vmatprep.mubr.f32.mxu0 0.0
        %2191 = vmatmul.mubr.f32.gmra.mrb[0].mxu0 %v2023
        %v2192 = vpop.f32.mrb[0].mxu0
        %v2193 = vadd.f32 0.0, %v2192
        %v2194 = vpop.f32.mrb[0].mxu0
        %2195 = vmatprep.mubr.f32.mxu0 0.0
        %2196 = vmatmul.mubr.f32.gmra.mrb[0].mxu0 %v2026
        %v2197 = vpop.f32.mrb[0].mxu0
        %v2198 = vadd.f32 0.0, %v2197
        %v2199 = vpop.f32.mrb[0].mxu0
        %2200 = vmatprep.mubr.f32.mxu0 0.0
        %2201 = vmatmul.mubr.f32.gmra.mrb[0].mxu0 %v2029
        %v2202 = vpop.f32.mrb[0].mxu0
        %v2203 = vadd.f32 0.0, %v2202
        %v2204 = vpop.f32.mrb[0].mxu0
        %2205 = vmatprep.mubr.f32.mxu0 0.0
        %2206 = vmatmul.mubr.f32.gmra.mrb[0].mxu0 %v2032
        %v2207 = vpop.f32.mrb[0].mxu0
        %v2208 = vadd.f32 0.0, %v2207
        %v2209 = vpop.f32.mrb[0].mxu0
        %2210 = vmatprep.mubr.f32.mxu0 0.0
        %2211 = vmatmul.mubr.f32.gmra.mrb[0].mxu0 %v2035
        %v2212 = vpop.f32.mrb[0].mxu0
        %v2213 = vadd.f32 0.0, %v2212
        %v2214 = vpop.f32.mrb[0].mxu0
        %2215 = vmatprep.mubr.f32.mxu0 0.0
        %2216 = vmatmul.mubr.f32.gmra.mrb[0].mxu0 %v2038
        %v2217 = vpop.f32.mrb[0].mxu0
        %v2218 = vadd.f32 0.0, %v2217
        %v2219 = vpop.f32.mrb[0].mxu0
        %2220 = vmatprep.mubr.f32.mxu0 0.0
        %2221 = vmatmul.mubr.f32.gmra.mrb[0].mxu0 %v2041
        %v2222 = vpop.f32.mrb[0].mxu0
        %v2223 = vadd.f32 0.0, %v2222
        %v2224 = vpop.f32.mrb[0].mxu0
        %2225 = vmatprep.mubr.f32.mxu0 0.0
        %2226 = vmatmul.mubr.f32.gmra.mrb[0].mxu0 %v2044
        %v2227 = vpop.f32.mrb[0].mxu0
        %v2228 = vadd.f32 0.0, %v2227
        %v2229 = vpop.f32.mrb[0].mxu0
        %2230 = vmatprep.mubr.f32.mxu0 0.0
        %2231 = vmatmul.mubr.f32.gmra.mrb[0].mxu0 %v2047
        %v2232 = vpop.f32.mrb[0].mxu0
        %v2233 = vadd.f32 0.0, %v2232
        %v2234 = vpop.f32.mrb[0].mxu0
        %2235 = vmatprep.mubr.f32.mxu0 0.0
        %2236 = vmatmul.mubr.f32.gmra.mrb[0].mxu0 %v2050
        %v2237 = vpop.f32.mrb[0].mxu0
        %v2238 = vadd.f32 0.0, %v2237
        %v2239 = vpop.f32.mrb[0].mxu0
        %2240 = vmatprep.mubr.f32.mxu0 0.0
        %2241 = vmatmul.mubr.f32.gmra.mrb[0].mxu0 %v2053
        %v2242 = vpop.f32.mrb[0].mxu0
        %v2243 = vadd.f32 0.0, %v2242
        %v2244 = vpop.f32.mrb[0].mxu0
        %2245 = vmatprep.mubr.f32.mxu0 0.0
        %2246 = vmatmul.mubr.f32.gmra.mrb[0].mxu0 %v2056
        %v2247 = vpop.f32.mrb[0].mxu0
        %v2248 = vadd.f32 0.0, %v2247
        %v2249 = vpop.f32.mrb[0].mxu0
        %2250 = vmatprep.mubr.f32.mxu0 0.0
        %2251 = vmatmul.mubr.f32.gmra.mrb[0].mxu0 %v2059
        %v2252 = vpop.f32.mrb[0].mxu0
        %v2253 = vadd.f32 0.0, %v2252
        %v2254 = vpop.f32.mrb[0].mxu0
        %2255 = vmatprep.mubr.f32.mxu0 0.0
        %2256 = vmatmul.mubr.f32.gmra.mrb[0].mxu0 %v2062
        %v2257 = vpop.f32.mrb[0].mxu0
        %v2258 = vadd.f32 0.0, %v2257
        %v2259 = vpop.f32.mrb[0].mxu0
        %2260 = vmatprep.mubr.f32.mxu0 0.0
        %2261 = vmatmul.mubr.f32.gmra.mrb[0].mxu0 %v2065
        %v2262 = vpop.f32.mrb[0].mxu0
        %v2263 = vadd.f32 0.0, %v2262
        %v2264 = vpop.f32.mrb[0].mxu0
        %2265 = vmatprep.mubr.f32.mxu0 0.0
        %2266 = vmatmul.mubr.f32.gmra.mrb[0].mxu0 %v2068
        %v2267 = vpop.f32.mrb[0].mxu0
        %v2268 = vadd.f32 0.0, %v2267
        %v2269 = vpop.f32.mrb[0].mxu0
        %2270 = vmatprep.mubr.f32.mxu0 0.0
        %2271 = vmatmul.mubr.f32.gmra.mrb[0].mxu0 %v2071
        %v2272 = vpop.f32.mrb[0].mxu0
        %v2273 = vadd.f32 0.0, %v2272
        %v2274 = vpop.f32.mrb[0].mxu0
        %2275 = vmatprep.mubr.f32.mxu0 0.0
        %2276 = vmatmul.mubr.f32.gmra.mrb[0].mxu0 %v2074
        %v2277 = vpop.f32.mrb[0].mxu0
        %v2278 = vadd.f32 0.0, %v2277
        %v2279 = vpop.f32.mrb[0].mxu0
        %2280 = vmatprep.mubr.f32.mxu0 0.0
        %2281 = vmatmul.mubr.f32.gmra.mrb[0].mxu0 %v2077
        %v2282 = vpop.f32.mrb[0].mxu0
        %v2283 = vadd.f32 0.0, %v2282
        %v2284 = vpop.f32.mrb[0].mxu0
        %2285 = vmatprep.mubr.f32.mxu0 0.0
        %2286 = vmatmul.mubr.f32.gmra.mrb[0].mxu0 %v2080
        %v2287 = vpop.f32.mrb[0].mxu0
        %v2288 = vadd.f32 0.0, %v2287
        %v2289 = vpop.f32.mrb[0].mxu0
        %2290 = vmatprep.mubr.f32.mxu0 0.0
        %2291 = vmatmul.mubr.f32.gmra.mrb[0].mxu0 %v2083
        %v2292 = vpop.f32.mrb[0].mxu0
        %v2293 = vadd.f32 0.0, %v2292
        %v2294 = vpop.f32.mrb[0].mxu0
        %2295 = vmatprep.mubr.f32.mxu0 0.0
        %2296 = vmatmul.mubr.f32.gmra.mrb[0].mxu0 %v2086
        %v2297 = vpop.f32.mrb[0].mxu0
        %v2298 = vadd.f32 0.0, %v2297
        %v2299 = vpop.f32.mrb[0].mxu0
        %2300 = vmatprep.mubr.f32.mxu0 0.0
        %2301 = vmatmul.mubr.f32.gmra.mrb[0].mxu0 %v2089
        %v2302 = vpop.f32.mrb[0].mxu0
        %v2303 = vadd.f32 0.0, %v2302
        %v2304 = vpop.f32.mrb[0].mxu0
        %2305 = vmatprep.mubr.f32.mxu0 0.0
        %2306 = vmatmul.mubr.f32.gmra.mrb[0].mxu0 %v2092
        %v2307 = vpop.f32.mrb[0].mxu0
        %v2308 = vadd.f32 0.0, %v2307
        %v2309 = vpop.f32.mrb[0].mxu0
        %2310 = vmatprep.mubr.f32.mxu0 0.0
        %2311 = vmatmul.mubr.f32.gmra.mrb[0].mxu0 %v2095
        %v2312 = vpop.f32.mrb[0].mxu0
        %v2313 = vadd.f32 0.0, %v2312
        %v2314 = vpop.f32.mrb[0].mxu0
        %2315 = vmatprep.mubr.f32.mxu0 0.0
        %2316 = vmatmul.mubr.f32.gmra.mrb[0].mxu0 %v2098
        %v2317 = vpop.f32.mrb[0].mxu0
        %v2318 = vadd.f32 0.0, %v2317
        %v2319 = vpop.f32.mrb[0].mxu0
        %2320 = vmatprep.mubr.f32.mxu0 0.0
        %2321 = vmatmul.mubr.f32.gmra.mrb[0].mxu0 %v2101
        %v2322 = vpop.f32.mrb[0].mxu0
        %v2323 = vadd.f32 0.0, %v2322
        %v2324 = vpop.f32.mrb[0].mxu0
        %2325 = vmatprep.mubr.f32.mxu0 0.0
        %2326 = vmatmul.mubr.f32.gmra.mrb[0].mxu0 %v2104
        %v2327 = vpop.f32.mrb[0].mxu0
        %v2328 = vadd.f32 0.0, %v2327
        %v2329 = vpop.f32.mrb[0].mxu0
        %2330 = vdwg.mxu0
        %v2331 = vld [vmem:[#allocation2] sm:$0xff]
        %v2332 = vld [vmem:[#allocation2 + $0x8] sm:$0xff]
        %v2333 = vld [vmem:[#allocation2 + $0x10] sm:$0xff]
        %v2334 = vld [vmem:[#allocation2 + $0x18] sm:$0xff]
        %v2335 = vld [vmem:[#allocation2 + $0x20] sm:$0xff]
        %v2336 = vld [vmem:[#allocation2 + $0x28] sm:$0xff]
        %v2337 = vld [vmem:[#allocation2 + $0x30] sm:$0xff]
        %v2338 = vld [vmem:[#allocation2 + $0x38] sm:$0xff]
        %v2339 = vld [vmem:[#allocation2 + $0x40] sm:$0xff]
        %v2340 = vld [vmem:[#allocation2 + $0x48] sm:$0xff]
        %v2341 = vld [vmem:[#allocation2 + $0x50] sm:$0xff]
        %v2342 = vld [vmem:[#allocation2 + $0x58] sm:$0xff]
        %v2343 = vld [vmem:[#allocation2 + $0x60] sm:$0xff]
        %v2344 = vld [vmem:[#allocation2 + $0x68] sm:$0xff]
        %v2345 = vld [vmem:[#allocation2 + $0x70] sm:$0xff]
        %v2346 = vld [vmem:[#allocation2 + $0x78] sm:$0xff]
        %v2347 = vld [vmem:[#allocation2 + $0x80] sm:$0xff]
        %v2348 = vld [vmem:[#allocation2 + $0x88] sm:$0xff]
        %v2349 = vld [vmem:[#allocation2 + $0x90] sm:$0xff]
        %v2350 = vld [vmem:[#allocation2 + $0x98] sm:$0xff]
        %v2351 = vld [vmem:[#allocation2 + $0xa0] sm:$0xff]
        %v2352 = vld [vmem:[#allocation2 + $0xa8] sm:$0xff]
        %v2353 = vld [vmem:[#allocation2 + $0xb0] sm:$0xff]
        %v2354 = vld [vmem:[#allocation2 + $0xb8] sm:$0xff]
        %v2355 = vld [vmem:[#allocation2 + $0xc0] sm:$0xff]
        %v2356 = vld [vmem:[#allocation2 + $0xc8] sm:$0xff]
        %v2357 = vld [vmem:[#allocation2 + $0xd0] sm:$0xff]
        %v2358 = vld [vmem:[#allocation2 + $0xd8] sm:$0xff]
        %v2359 = vld [vmem:[#allocation2 + $0xe0] sm:$0xff]
        %v2360 = vld [vmem:[#allocation2 + $0xe8] sm:$0xff]
        %v2361 = vld [vmem:[#allocation2 + $0xf0] sm:$0xff]
        %v2362 = vld [vmem:[#allocation2 + $0xf8] sm:$0xff]
        %s2363 = scalar_lea.vmem %s1, 32
        %v2364 = vld [vmem:[%s2363] sm:$0xff]
        %v2365 = vld [vmem:[%s2363 + $0x8] sm:$0xff]
        %v2367 = vsel %vm817, %v2173, 0
        %v2370 = vsel %vm817, %v2178, 0
        %v2373 = vsel %vm817, %v2183, 0
        %v2376 = vsel %vm817, %v2188, 0
        %v2379 = vsel %vm817, %v2193, 0
        %v2382 = vsel %vm817, %v2198, 0
        %v2385 = vsel %vm817, %v2203, 0
        %v2388 = vsel %vm817, %v2208, 0
        %v2391 = vsel %vm817, %v2213, 0
        %v2394 = vsel %vm817, %v2218, 0
        %v2397 = vsel %vm817, %v2223, 0
        %v2400 = vsel %vm817, %v2228, 0
        %v2403 = vsel %vm817, %v2233, 0
        %v2406 = vsel %vm817, %v2238, 0
        %v2409 = vsel %vm817, %v2243, 0
        %v2412 = vsel %vm817, %v2248, 0
        %v2415 = vsel %vm817, %v2253, 0
        %v2418 = vsel %vm817, %v2258, 0
        %v2421 = vsel %vm817, %v2263, 0
        %v2424 = vsel %vm817, %v2268, 0
        %v2427 = vsel %vm817, %v2273, 0
        %v2430 = vsel %vm817, %v2278, 0
        %v2433 = vsel %vm817, %v2283, 0
        %v2436 = vsel %vm817, %v2288, 0
        %v2439 = vsel %vm817, %v2293, 0
        %v2442 = vsel %vm817, %v2298, 0
        %v2445 = vsel %vm817, %v2303, 0
        %v2448 = vsel %vm817, %v2308, 0
        %v2451 = vsel %vm817, %v2313, 0
        %v2454 = vsel %vm817, %v2318, 0
        %v2457 = vsel %vm817, %v2323, 0
        %v2460 = vsel %vm817, %v2328, 0
        %2462 = vmatprep.subr.mxu0 0.0
        %2463 = vmatpush1.msra.mxu0 %v2364
        %2464 = vmatprep.subr.mxu0 0.0
        %2465 = vmatpush1.msra.mxu0 %v2365
        %2466 = vmatprep.subr.mxu0 0.0
        %2467 = vmatpush1.msra.mxu0 0.0
        %2468 = vmatprep.subr.mxu0 0.0
        %2469 = vmatpush1.msra.mxu0 0.0
        %2470 = vmatprep.subr.mxu0 0.0
        %2471 = vmatpush1.msra.mxu0 0.0
        %2472 = vmatprep.subr.mxu0 0.0
        %2473 = vmatpush1.msra.mxu0 0.0
        %2474 = vmatprep.subr.mxu0 0.0
        %2475 = vmatpush1.msra.mxu0 0.0
        %2476 = vmatprep.subr.mxu0 0.0
        %2477 = vmatpush1.msra.mxu0 0.0
        %2478 = vmatprep.subr.mxu0 0.0
        %2479 = vmatpush1.msra.mxu0 0.0
        %2480 = vmatprep.subr.mxu0 0.0
        %2481 = vmatpush1.msra.mxu0 0.0
        %2482 = vmatprep.subr.mxu0 0.0
        %2483 = vmatpush1.msra.mxu0 0.0
        %2484 = vmatprep.subr.mxu0 0.0
        %2485 = vmatpush1.msra.mxu0 0.0
        %2486 = vmatprep.subr.mxu0 0.0
        %2487 = vmatpush1.msra.mxu0 0.0
        %2488 = vmatprep.subr.mxu0 0.0
        %2489 = vmatpush1.msra.mxu0 0.0
        %2490 = vmatprep.subr.mxu0 0.0
        %2491 = vmatpush1.msra.mxu0 0.0
        %2492 = vmatprep.subr.mxu0 0.0
        %2493 = vmatpush1.msra.mxu0 0.0
        %2494 = vmatprep.subr.mxu0 0.0
        %2495 = vmatpush1.msra.mxu0 0.0
        %2496 = vmatprep.subr.mxu0 0.0
        %2497 = vmatpush1.msra.mxu0 0.0
        %2498 = vmatprep.subr.mxu0 0.0
        %2499 = vmatpush1.msra.mxu0 0.0
        %2500 = vmatprep.subr.mxu0 0.0
        %2501 = vmatpush1.msra.mxu0 0.0
        %2502 = vmatprep.subr.mxu0 0.0
        %2503 = vmatpush1.msra.mxu0 0.0
        %2504 = vmatprep.subr.mxu0 0.0
        %2505 = vmatpush1.msra.mxu0 0.0
        %2506 = vmatprep.subr.mxu0 0.0
        %2507 = vmatpush1.msra.mxu0 0.0
        %2508 = vmatprep.subr.mxu0 0.0
        %2509 = vmatpush1.msra.mxu0 0.0
        %2510 = vmatprep.subr.mxu0 0.0
        %2511 = vmatpush1.msra.mxu0 0.0
        %2512 = vmatprep.subr.mxu0 0.0
        %2513 = vmatpush1.msra.mxu0 0.0
        %2514 = vmatprep.subr.mxu0 0.0
        %2515 = vmatpush1.msra.mxu0 0.0
        %2516 = vmatprep.subr.mxu0 0.0
        %2517 = vmatpush1.msra.mxu0 0.0
        %2518 = vmatprep.subr.mxu0 0.0
        %2519 = vmatpush1.msra.mxu0 0.0
        %2520 = vmatprep.subr.mxu0 0.0
        %2521 = vmatpush1.msra.mxu0 0.0
        %2522 = vmatprep.subr.mxu0 0.0
        %2523 = vmatpush1.msra.mxu0 0.0
        %2524 = vmatprep.subr.mxu0 0.0
        %2525 = vmatpush1.msra.mxu0 0.0
        %2526 = vmatprep.mubr.f32.mxu0 0.0
        %2527 = vmatmul.mubr.f32.gmra.mrb[0].mxu0 %v2367
        %v2528 = vpop.f32.mrb[0].mxu0
        %v2529 = vadd.f32 0.0, %v2528
        %v2530 = vpop.f32.mrb[0].mxu0
        %2531 = vmatprep.mubr.f32.mxu0 0.0
        %2532 = vmatmul.mubr.f32.gmra.mrb[0].mxu0 %v2370
        %v2533 = vpop.f32.mrb[0].mxu0
        %v2534 = vadd.f32 0.0, %v2533
        %v2535 = vpop.f32.mrb[0].mxu0
        %2536 = vmatprep.mubr.f32.mxu0 0.0
        %2537 = vmatmul.mubr.f32.gmra.mrb[0].mxu0 %v2373
        %v2538 = vpop.f32.mrb[0].mxu0
        %v2539 = vadd.f32 0.0, %v2538
        %v2540 = vpop.f32.mrb[0].mxu0
        %2541 = vmatprep.mubr.f32.mxu0 0.0
        %2542 = vmatmul.mubr.f32.gmra.mrb[0].mxu0 %v2376
        %v2543 = vpop.f32.mrb[0].mxu0
        %v2544 = vadd.f32 0.0, %v2543
        %v2545 = vpop.f32.mrb[0].mxu0
        %2546 = vmatprep.mubr.f32.mxu0 0.0
        %2547 = vmatmul.mubr.f32.gmra.mrb[0].mxu0 %v2379
        %v2548 = vpop.f32.mrb[0].mxu0
        %v2549 = vadd.f32 0.0, %v2548
        %v2550 = vpop.f32.mrb[0].mxu0
        %2551 = vmatprep.mubr.f32.mxu0 0.0
        %2552 = vmatmul.mubr.f32.gmra.mrb[0].mxu0 %v2382
        %v2553 = vpop.f32.mrb[0].mxu0
        %v2554 = vadd.f32 0.0, %v2553
        %v2555 = vpop.f32.mrb[0].mxu0
        %2556 = vmatprep.mubr.f32.mxu0 0.0
        %2557 = vmatmul.mubr.f32.gmra.mrb[0].mxu0 %v2385
        %v2558 = vpop.f32.mrb[0].mxu0
        %v2559 = vadd.f32 0.0, %v2558
        %v2560 = vpop.f32.mrb[0].mxu0
        %2561 = vmatprep.mubr.f32.mxu0 0.0
        %2562 = vmatmul.mubr.f32.gmra.mrb[0].mxu0 %v2388
        %v2563 = vpop.f32.mrb[0].mxu0
        %v2564 = vadd.f32 0.0, %v2563
        %v2565 = vpop.f32.mrb[0].mxu0
        %2566 = vmatprep.mubr.f32.mxu0 0.0
        %2567 = vmatmul.mubr.f32.gmra.mrb[0].mxu0 %v2391
        %v2568 = vpop.f32.mrb[0].mxu0
        %v2569 = vadd.f32 0.0, %v2568
        %v2570 = vpop.f32.mrb[0].mxu0
        %2571 = vmatprep.mubr.f32.mxu0 0.0
        %2572 = vmatmul.mubr.f32.gmra.mrb[0].mxu0 %v2394
        %v2573 = vpop.f32.mrb[0].mxu0
        %v2574 = vadd.f32 0.0, %v2573
        %v2575 = vpop.f32.mrb[0].mxu0
        %2576 = vmatprep.mubr.f32.mxu0 0.0
        %2577 = vmatmul.mubr.f32.gmra.mrb[0].mxu0 %v2397
        %v2578 = vpop.f32.mrb[0].mxu0
        %v2579 = vadd.f32 0.0, %v2578
        %v2580 = vpop.f32.mrb[0].mxu0
        %2581 = vmatprep.mubr.f32.mxu0 0.0
        %2582 = vmatmul.mubr.f32.gmra.mrb[0].mxu0 %v2400
        %v2583 = vpop.f32.mrb[0].mxu0
        %v2584 = vadd.f32 0.0, %v2583
        %v2585 = vpop.f32.mrb[0].mxu0
        %2586 = vmatprep.mubr.f32.mxu0 0.0
        %2587 = vmatmul.mubr.f32.gmra.mrb[0].mxu0 %v2403
        %v2588 = vpop.f32.mrb[0].mxu0
        %v2589 = vadd.f32 0.0, %v2588
        %v2590 = vpop.f32.mrb[0].mxu0
        %2591 = vmatprep.mubr.f32.mxu0 0.0
        %2592 = vmatmul.mubr.f32.gmra.mrb[0].mxu0 %v2406
        %v2593 = vpop.f32.mrb[0].mxu0
        %v2594 = vadd.f32 0.0, %v2593
        %v2595 = vpop.f32.mrb[0].mxu0
        %2596 = vmatprep.mubr.f32.mxu0 0.0
        %2597 = vmatmul.mubr.f32.gmra.mrb[0].mxu0 %v2409
        %v2598 = vpop.f32.mrb[0].mxu0
        %v2599 = vadd.f32 0.0, %v2598
        %v2600 = vpop.f32.mrb[0].mxu0
        %2601 = vmatprep.mubr.f32.mxu0 0.0
        %2602 = vmatmul.mubr.f32.gmra.mrb[0].mxu0 %v2412
        %v2603 = vpop.f32.mrb[0].mxu0
        %v2604 = vadd.f32 0.0, %v2603
        %v2605 = vpop.f32.mrb[0].mxu0
        %2606 = vmatprep.mubr.f32.mxu0 0.0
        %2607 = vmatmul.mubr.f32.gmra.mrb[0].mxu0 %v2415
        %v2608 = vpop.f32.mrb[0].mxu0
        %v2609 = vadd.f32 0.0, %v2608
        %v2610 = vpop.f32.mrb[0].mxu0
        %2611 = vmatprep.mubr.f32.mxu0 0.0
        %2612 = vmatmul.mubr.f32.gmra.mrb[0].mxu0 %v2418
        %v2613 = vpop.f32.mrb[0].mxu0
        %v2614 = vadd.f32 0.0, %v2613
        %v2615 = vpop.f32.mrb[0].mxu0
        %2616 = vmatprep.mubr.f32.mxu0 0.0
        %2617 = vmatmul.mubr.f32.gmra.mrb[0].mxu0 %v2421
        %v2618 = vpop.f32.mrb[0].mxu0
        %v2619 = vadd.f32 0.0, %v2618
        %v2620 = vpop.f32.mrb[0].mxu0
        %2621 = vmatprep.mubr.f32.mxu0 0.0
        %2622 = vmatmul.mubr.f32.gmra.mrb[0].mxu0 %v2424
        %v2623 = vpop.f32.mrb[0].mxu0
        %v2624 = vadd.f32 0.0, %v2623
        %v2625 = vpop.f32.mrb[0].mxu0
        %2626 = vmatprep.mubr.f32.mxu0 0.0
        %2627 = vmatmul.mubr.f32.gmra.mrb[0].mxu0 %v2427
        %v2628 = vpop.f32.mrb[0].mxu0
        %v2629 = vadd.f32 0.0, %v2628
        %v2630 = vpop.f32.mrb[0].mxu0
        %2631 = vmatprep.mubr.f32.mxu0 0.0
        %2632 = vmatmul.mubr.f32.gmra.mrb[0].mxu0 %v2430
        %v2633 = vpop.f32.mrb[0].mxu0
        %v2634 = vadd.f32 0.0, %v2633
        %v2635 = vpop.f32.mrb[0].mxu0
        %2636 = vmatprep.mubr.f32.mxu0 0.0
        %2637 = vmatmul.mubr.f32.gmra.mrb[0].mxu0 %v2433
        %v2638 = vpop.f32.mrb[0].mxu0
        %v2639 = vadd.f32 0.0, %v2638
        %v2640 = vpop.f32.mrb[0].mxu0
        %2641 = vmatprep.mubr.f32.mxu0 0.0
        %2642 = vmatmul.mubr.f32.gmra.mrb[0].mxu0 %v2436
        %v2643 = vpop.f32.mrb[0].mxu0
        %v2644 = vadd.f32 0.0, %v2643
        %v2645 = vpop.f32.mrb[0].mxu0
        %2646 = vmatprep.mubr.f32.mxu0 0.0
        %2647 = vmatmul.mubr.f32.gmra.mrb[0].mxu0 %v2439
        %v2648 = vpop.f32.mrb[0].mxu0
        %v2649 = vadd.f32 0.0, %v2648
        %v2650 = vpop.f32.mrb[0].mxu0
        %2651 = vmatprep.mubr.f32.mxu0 0.0
        %2652 = vmatmul.mubr.f32.gmra.mrb[0].mxu0 %v2442
        %v2653 = vpop.f32.mrb[0].mxu0
        %v2654 = vadd.f32 0.0, %v2653
        %v2655 = vpop.f32.mrb[0].mxu0
        %2656 = vmatprep.mubr.f32.mxu0 0.0
        %2657 = vmatmul.mubr.f32.gmra.mrb[0].mxu0 %v2445
        %v2658 = vpop.f32.mrb[0].mxu0
        %v2659 = vadd.f32 0.0, %v2658
        %v2660 = vpop.f32.mrb[0].mxu0
        %2661 = vmatprep.mubr.f32.mxu0 0.0
        %2662 = vmatmul.mubr.f32.gmra.mrb[0].mxu0 %v2448
        %v2663 = vpop.f32.mrb[0].mxu0
        %v2664 = vadd.f32 0.0, %v2663
        %v2665 = vpop.f32.mrb[0].mxu0
        %2666 = vmatprep.mubr.f32.mxu0 0.0
        %2667 = vmatmul.mubr.f32.gmra.mrb[0].mxu0 %v2451
        %v2668 = vpop.f32.mrb[0].mxu0
        %v2669 = vadd.f32 0.0, %v2668
        %v2670 = vpop.f32.mrb[0].mxu0
        %2671 = vmatprep.mubr.f32.mxu0 0.0
        %2672 = vmatmul.mubr.f32.gmra.mrb[0].mxu0 %v2454
        %v2673 = vpop.f32.mrb[0].mxu0
        %v2674 = vadd.f32 0.0, %v2673
        %v2675 = vpop.f32.mrb[0].mxu0
        %2676 = vmatprep.mubr.f32.mxu0 0.0
        %2677 = vmatmul.mubr.f32.gmra.mrb[0].mxu0 %v2457
        %v2678 = vpop.f32.mrb[0].mxu0
        %v2679 = vadd.f32 0.0, %v2678
        %v2680 = vpop.f32.mrb[0].mxu0
        %2681 = vmatprep.mubr.f32.mxu0 0.0
        %2682 = vmatmul.mubr.f32.gmra.mrb[0].mxu0 %v2460
        %v2683 = vpop.f32.mrb[0].mxu0
        %v2684 = vadd.f32 0.0, %v2683
        %v2685 = vpop.f32.mrb[0].mxu0
        %2686 = vdwg.mxu0
        %v2687 = vadd.f32 %v2331, %v2529
        %v2688 = vadd.f32 %v2332, %v2534
        %v2689 = vadd.f32 %v2333, %v2539
        %v2690 = vadd.f32 %v2334, %v2544
        %v2691 = vadd.f32 %v2335, %v2549
        %v2692 = vadd.f32 %v2336, %v2554
        %v2693 = vadd.f32 %v2337, %v2559
        %v2694 = vadd.f32 %v2338, %v2564
        %v2695 = vadd.f32 %v2339, %v2569
        %v2696 = vadd.f32 %v2340, %v2574
        %v2697 = vadd.f32 %v2341, %v2579
        %v2698 = vadd.f32 %v2342, %v2584
        %v2699 = vadd.f32 %v2343, %v2589
        %v2700 = vadd.f32 %v2344, %v2594
        %v2701 = vadd.f32 %v2345, %v2599
        %v2702 = vadd.f32 %v2346, %v2604
        %v2703 = vadd.f32 %v2347, %v2609
        %v2704 = vadd.f32 %v2348, %v2614
        %v2705 = vadd.f32 %v2349, %v2619
        %v2706 = vadd.f32 %v2350, %v2624
        %v2707 = vadd.f32 %v2351, %v2629
        %v2708 = vadd.f32 %v2352, %v2634
        %v2709 = vadd.f32 %v2353, %v2639
        %v2710 = vadd.f32 %v2354, %v2644
        %v2711 = vadd.f32 %v2355, %v2649
        %v2712 = vadd.f32 %v2356, %v2654
        %v2713 = vadd.f32 %v2357, %v2659
        %v2714 = vadd.f32 %v2358, %v2664
        %v2715 = vadd.f32 %v2359, %v2669
        %v2716 = vadd.f32 %v2360, %v2674
        %v2717 = vadd.f32 %v2361, %v2679
        %v2718 = vadd.f32 %v2362, %v2684
        %2719 = vst.msk [vmem:[#allocation2] sm:$0xff] %vm396, %v2687
        %2720 = vst.msk [vmem:[#allocation2 + $0x8] sm:$0xff] %vm396, %v2688
        %2721 = vst.msk [vmem:[#allocation2 + $0x10] sm:$0xff] %vm396, %v2689
        %2722 = vst.msk [vmem:[#allocation2 + $0x18] sm:$0xff] %vm396, %v2690
        %2723 = vst.msk [vmem:[#allocation2 + $0x20] sm:$0xff] %vm396, %v2691
        %2724 = vst.msk [vmem:[#allocation2 + $0x28] sm:$0xff] %vm396, %v2692
        %2725 = vst.msk [vmem:[#allocation2 + $0x30] sm:$0xff] %vm396, %v2693
        %2726 = vst.msk [vmem:[#allocation2 + $0x38] sm:$0xff] %vm396, %v2694
        %2727 = vst.msk [vmem:[#allocation2 + $0x40] sm:$0xff] %vm396, %v2695
        %2728 = vst.msk [vmem:[#allocation2 + $0x48] sm:$0xff] %vm396, %v2696
        %2729 = vst.msk [vmem:[#allocation2 + $0x50] sm:$0xff] %vm396, %v2697
        %2730 = vst.msk [vmem:[#allocation2 + $0x58] sm:$0xff] %vm396, %v2698
        %2731 = vst.msk [vmem:[#allocation2 + $0x60] sm:$0xff] %vm396, %v2699
        %2732 = vst.msk [vmem:[#allocation2 + $0x68] sm:$0xff] %vm396, %v2700
        %2733 = vst.msk [vmem:[#allocation2 + $0x70] sm:$0xff] %vm396, %v2701
        %2734 = vst.msk [vmem:[#allocation2 + $0x78] sm:$0xff] %vm396, %v2702
        %2735 = vst.msk [vmem:[#allocation2 + $0x80] sm:$0xff] %vm396, %v2703
        %2736 = vst.msk [vmem:[#allocation2 + $0x88] sm:$0xff] %vm396, %v2704
        %2737 = vst.msk [vmem:[#allocation2 + $0x90] sm:$0xff] %vm396, %v2705
        %2738 = vst.msk [vmem:[#allocation2 + $0x98] sm:$0xff] %vm396, %v2706
        %2739 = vst.msk [vmem:[#allocation2 + $0xa0] sm:$0xff] %vm396, %v2707
        %2740 = vst.msk [vmem:[#allocation2 + $0xa8] sm:$0xff] %vm396, %v2708
        %2741 = vst.msk [vmem:[#allocation2 + $0xb0] sm:$0xff] %vm396, %v2709
        %2742 = vst.msk [vmem:[#allocation2 + $0xb8] sm:$0xff] %vm396, %v2710
        %2743 = vst.msk [vmem:[#allocation2 + $0xc0] sm:$0xff] %vm396, %v2711
        %2744 = vst.msk [vmem:[#allocation2 + $0xc8] sm:$0xff] %vm396, %v2712
        %2745 = vst.msk [vmem:[#allocation2 + $0xd0] sm:$0xff] %vm396, %v2713
        %2746 = vst.msk [vmem:[#allocation2 + $0xd8] sm:$0xff] %vm396, %v2714
        %2747 = vst.msk [vmem:[#allocation2 + $0xe0] sm:$0xff] %vm396, %v2715
        %2748 = vst.msk [vmem:[#allocation2 + $0xe8] sm:$0xff] %vm396, %v2716
        %2749 = vst.msk [vmem:[#allocation2 + $0xf0] sm:$0xff] %vm396, %v2717
        %2750 = vst.msk [vmem:[#allocation2 + $0xf8] sm:$0xff] %vm396, %v2718
        %v2751 = vld [vmem:[#allocation2] sm:$0xff]
        %v2752 = vld [vmem:[#allocation2 + $0x8] sm:$0xff]
        %v2753 = vld [vmem:[#allocation2 + $0x10] sm:$0xff]
        %v2754 = vld [vmem:[#allocation2 + $0x18] sm:$0xff]
        %v2755 = vld [vmem:[#allocation2 + $0x20] sm:$0xff]
        %v2756 = vld [vmem:[#allocation2 + $0x28] sm:$0xff]
        %v2757 = vld [vmem:[#allocation2 + $0x30] sm:$0xff]
        %v2758 = vld [vmem:[#allocation2 + $0x38] sm:$0xff]
        %v2759 = vld [vmem:[#allocation2 + $0x40] sm:$0xff]
        %v2760 = vld [vmem:[#allocation2 + $0x48] sm:$0xff]
        %v2761 = vld [vmem:[#allocation2 + $0x50] sm:$0xff]
        %v2762 = vld [vmem:[#allocation2 + $0x58] sm:$0xff]
        %v2763 = vld [vmem:[#allocation2 + $0x60] sm:$0xff]
        %v2764 = vld [vmem:[#allocation2 + $0x68] sm:$0xff]
        %v2765 = vld [vmem:[#allocation2 + $0x70] sm:$0xff]
        %v2766 = vld [vmem:[#allocation2 + $0x78] sm:$0xff]
        %v2767 = vld [vmem:[#allocation2 + $0x80] sm:$0xff]
        %v2768 = vld [vmem:[#allocation2 + $0x88] sm:$0xff]
        %v2769 = vld [vmem:[#allocation2 + $0x90] sm:$0xff]
        %v2770 = vld [vmem:[#allocation2 + $0x98] sm:$0xff]
        %v2771 = vld [vmem:[#allocation2 + $0xa0] sm:$0xff]
        %v2772 = vld [vmem:[#allocation2 + $0xa8] sm:$0xff]
        %v2773 = vld [vmem:[#allocation2 + $0xb0] sm:$0xff]
        %v2774 = vld [vmem:[#allocation2 + $0xb8] sm:$0xff]
        %v2775 = vld [vmem:[#allocation2 + $0xc0] sm:$0xff]
        %v2776 = vld [vmem:[#allocation2 + $0xc8] sm:$0xff]
        %v2777 = vld [vmem:[#allocation2 + $0xd0] sm:$0xff]
        %v2778 = vld [vmem:[#allocation2 + $0xd8] sm:$0xff]
        %v2779 = vld [vmem:[#allocation2 + $0xe0] sm:$0xff]
        %v2780 = vld [vmem:[#allocation2 + $0xe8] sm:$0xff]
        %v2781 = vld [vmem:[#allocation2 + $0xf0] sm:$0xff]
        %v2782 = vld [vmem:[#allocation2 + $0xf8] sm:$0xff]
        %2783 = vst.msk [vmem:[%s190] sm:$0xff] %vm396, %v2751
        %2784 = vst.msk [vmem:[%s190 + $0x8] sm:$0xff] %vm396, %v2752
        %2785 = vst.msk [vmem:[%s190 + $0x10] sm:$0xff] %vm396, %v2753
        %2786 = vst.msk [vmem:[%s190 + $0x18] sm:$0xff] %vm396, %v2754
        %2787 = vst.msk [vmem:[%s190 + $0x20] sm:$0xff] %vm396, %v2755
        %2788 = vst.msk [vmem:[%s190 + $0x28] sm:$0xff] %vm396, %v2756
        %2789 = vst.msk [vmem:[%s190 + $0x30] sm:$0xff] %vm396, %v2757
        %2790 = vst.msk [vmem:[%s190 + $0x38] sm:$0xff] %vm396, %v2758
        %2791 = vst.msk [vmem:[%s190 + $0x40] sm:$0xff] %vm396, %v2759
        %2792 = vst.msk [vmem:[%s190 + $0x48] sm:$0xff] %vm396, %v2760
        %2793 = vst.msk [vmem:[%s190 + $0x50] sm:$0xff] %vm396, %v2761
        %2794 = vst.msk [vmem:[%s190 + $0x58] sm:$0xff] %vm396, %v2762
        %2795 = vst.msk [vmem:[%s190 + $0x60] sm:$0xff] %vm396, %v2763
        %2796 = vst.msk [vmem:[%s190 + $0x68] sm:$0xff] %vm396, %v2764
        %2797 = vst.msk [vmem:[%s190 + $0x70] sm:$0xff] %vm396, %v2765
        %2798 = vst.msk [vmem:[%s190 + $0x78] sm:$0xff] %vm396, %v2766
        %2799 = vst.msk [vmem:[%s190 + $0x80] sm:$0xff] %vm396, %v2767
        %2800 = vst.msk [vmem:[%s190 + $0x88] sm:$0xff] %vm396, %v2768
        %2801 = vst.msk [vmem:[%s190 + $0x90] sm:$0xff] %vm396, %v2769
        %2802 = vst.msk [vmem:[%s190 + $0x98] sm:$0xff] %vm396, %v2770
        %2803 = vst.msk [vmem:[%s190 + $0xa0] sm:$0xff] %vm396, %v2771
        %2804 = vst.msk [vmem:[%s190 + $0xa8] sm:$0xff] %vm396, %v2772
        %2805 = vst.msk [vmem:[%s190 + $0xb0] sm:$0xff] %vm396, %v2773
        %2806 = vst.msk [vmem:[%s190 + $0xb8] sm:$0xff] %vm396, %v2774
        %2807 = vst.msk [vmem:[%s190 + $0xc0] sm:$0xff] %vm396, %v2775
        %2808 = vst.msk [vmem:[%s190 + $0xc8] sm:$0xff] %vm396, %v2776
        %2809 = vst.msk [vmem:[%s190 + $0xd0] sm:$0xff] %vm396, %v2777
        %2810 = vst.msk [vmem:[%s190 + $0xd8] sm:$0xff] %vm396, %v2778
        %2811 = vst.msk [vmem:[%s190 + $0xe0] sm:$0xff] %vm396, %v2779
        %2812 = vst.msk [vmem:[%s190 + $0xe8] sm:$0xff] %vm396, %v2780
        %2813 = vst.msk [vmem:[%s190 + $0xf0] sm:$0xff] %vm396, %v2781
        %2814 = vst.msk [vmem:[%s190 + $0xf8] sm:$0xff] %vm396, %v2782
        %s2815 = sand.u32 %s115, 1
        %s2816 = scalar_lea.sflag [#allocation4], %s2815
        %s2817 = sand.u32 %s115, 1
        %s2818 = smul.addr %s2817, 256
        %s2819 = scalar_lea.vmem [#allocation3], %s2818
        // Predicated region
        $region37: #{upsample_forward.1} parent=35 // pred_check
          %p2820 = pneg %p125
        $region38: #{upsample_forward.1} parent=35 // pred_check_branch
          %2822 = sbr.rel (%p2820) target = $region40
        $region39: #{upsample_forward.1} parent=35 // pred_region
          %s2824 = ssub.s32 4096, 4096
          %2825 = vsyncadd %s2816, %s2824
          %s2826 = smul.addr %s18, 32
          %s2827 = smul.addr %s2826, 128
          %s2828 = scalar_lea.hbm %s4, %s2827
          %s2829 = sshll.u32 %s2819, 4
          %s2830 = int_to_ptr.vmem [resolvable:$true] %s2829
          %2835 = dma.vmem_to_hbm [thread:$0]  %s2830, 4096, %s2828, %s2816, 128, 128, 8
        $region40: #{upsample_forward.1} parent=35 // pred_fallthru
          _
      $region36: #{upsample_forward.1} parent=5 // pred_fallthru
        _
      %p2836 = scmp.le.s32.totalorder 2, %s13
      // Predicated region
      $region41: #{upsample_forward.1} parent=5 // pred_check
        %p2837 = pneg %p2836
      $region42: #{upsample_forward.1} parent=5 // pred_check_branch
        %2839 = sbr.rel (%p2837) target = $region44
      $region43: #{upsample_forward.1} parent=5 // pred_region
        %s2840 = ssub.s32 %s13, 2
        // Predicated region
        $region45: #{upsample_forward.1} parent=43 // pred_check
          %p2841 = pneg %p131
        $region46: #{upsample_forward.1} parent=43 // pred_check_branch
          %2843 = sbr.rel (%p2841) target = $region48
        $region47: #{upsample_forward.1} parent=43 // pred_region
          %s2844 = sand.u32 %s116, 1
          %s2845 = scalar_lea.sflag [#allocation4], %s2844
          %s2846 = sand.u32 %s116, 1
          %s2847 = smul.addr %s2846, 256
          %s2848 = scalar_lea.vmem [#allocation3], %s2847
          %2849 = dma.done %s2845, 4096
        $region48: #{upsample_forward.1} parent=43 // pred_fallthru
          _
      $region44: #{upsample_forward.1} parent=5 // pred_fallthru
        _
    $region6: #{upsample_forward.1} parent=1 // loop_footer
      %s17 = sadd.s32 1, %s13
    $region7: #{upsample_forward.1} parent=1 // loop_footer_branch
      %12 = sbr.rel target = $region3
    $region8: #{upsample_forward.1} parent=1 // loop_exit
      _
    %2850 = vsyncpa [#allocation4], 1
    %s2851 = scalar_lea.sflag [#allocation4], 1
    %2852 = vsyncpa %s2851, 1

</llo_original>
